<compile_context>
chip_gen: v7x
topology: tpu7x:2x2x1
jax: 0.10.0
libtpu: 0.0.40
codegen_flags: <defaults>
</compile_context>

<pallas_src>
import numpy as np
import jax
import jax.numpy as jnp
from jax.experimental import pallas as pl
from jax.experimental.pallas import tpu as pltpu


# ----------------------------------------------------------------------------
# Linear-operator builders (host numpy, computed once at init time)
# ----------------------------------------------------------------------------
def adaptive_pool_matrix_1d(in_size: int, out_size: int) -> np.ndarray:
    """Row-stochastic matrix implementing torch AdaptiveAvgPool1d semantics."""
    M = np.zeros((out_size, in_size), dtype=np.float32)
    for i in range(out_size):
        start = (i * in_size) // out_size
        end = -(-((i + 1) * in_size) // out_size)  # ceil division
        M[i, start:end] = 1.0 / float(end - start)
    return M


def bilinear_upsample_matrix_1d(out_size: int, in_size: int) -> np.ndarray:
    """Matrix for F.interpolate(..., mode='bilinear', align_corners=True), 1 axis."""
    A = np.zeros((out_size, in_size), dtype=np.float32)
    if in_size == 1:
        A[:, 0] = 1.0
        return A
    for o in range(out_size):
        src = o * (in_size - 1) / (out_size - 1)
        lo = int(np.floor(src))
        hi = min(lo + 1, in_size - 1)
        w = src - lo
        A[o, lo] += 1.0 - w
        A[o, hi] += w
    return A


def _round_up(x: int, m: int) -> int:
    return ((x + m - 1) // m) * m


def _choose_hw_tile(hw_pad: int, max_tile: int) -> int:
    """Largest multiple of 128 that divides hw_pad and is <= max_tile."""
    if hw_pad <= max_tile:
        return hw_pad
    for t in range(max_tile - max_tile % 128, 127, -128):
        if hw_pad % t == 0:
            return t
    return 128  # hw_pad is always a multiple of 128


def _vmem_limit_bytes():
    """Scoped VMEM budget: 64 MiB on 128-MiB parts (v5e/v6e), ~65% of physical
    on smaller-VMEM parts (v7x: ~41 MiB of 64 MiB)."""
    try:
        cap = getattr(pltpu.get_tpu_info(), "vmem_capacity_bytes", None)
        if cap is None:
            return None
        return int(min(64 * 1024 * 1024, cap * 0.65))
    except Exception:
        return None  # fall back to the compiler default


# ----------------------------------------------------------------------------
# Kernel 1: adaptive pooling (all bins fused).  grid (N, HW_tiles); HW is the
# reduction axis, accumulated directly in the resident f32 output block.
# ----------------------------------------------------------------------------
def _pool_kernel(x_ref, m_ref, p_ref):
    # x_ref: (1, Cin, hw_tile)  f32, NCHW activation tile (native layout)
    # m_ref: (hw_tile, bb_pad)  bf16, stacked adaptive-pool operator tile
    # p_ref: (1, Cin, bb_pad)   f32 output, resident across the HW grid axis
    t = pl.program_id(1)

    @pl.when(t == 0)
    def _init():
        p_ref[...] = jnp.zeros_like(p_ref)

    # bf16 cast happens in-kernel (x is read from HBM exactly once, as f32 NCHW).
    xt = x_ref[0].astype(jnp.bfloat16)
    p_ref[0] += jnp.dot(xt, m_ref[...], preferred_element_type=jnp.float32)


def _pool(x_flat, m_T, *, hw_tile, bb_pad, vmem_limit):
    N, Cin, HW_pad = x_flat.shape
    n_hw = HW_pad // hw_tile
    return pl.pallas_call(
        _pool_kernel,
        out_shape=jax.ShapeDtypeStruct((N, Cin, bb_pad), jnp.float32),
        grid=(N, n_hw),
        in_specs=[
            pl.BlockSpec((1, Cin, hw_tile), lambda n, t: (n, 0, t)),
            pl.BlockSpec((hw_tile, bb_pad), lambda n, t: (t, 0)),
        ],
        out_specs=pl.BlockSpec((1, Cin, bb_pad), lambda n, t: (n, 0, 0)),
        compiler_params=pltpu.CompilerParams(
            dimension_semantics=("parallel", "arbitrary"),
            vmem_limit_bytes=vmem_limit),
    )(x_flat, m_T)


# ----------------------------------------------------------------------------
# Kernel 2: 1x1 conv (BN scale folded) + BN shift + ReLU + block-diag bin mask.
# Tiny (runs once per image, off the streaming critical path), kept in f32.
# The constant operands here are small relative to the VMEM budget; keeping
# them out of the streaming kernels is what frees VMEM for big HW tiles.
# ----------------------------------------------------------------------------
def _conv_bn_relu_kernel(p_ref, w_ref, shift_ref, mask_ref, z_ref):
    # p_ref:     (1, Cin, bb_pad) f32 pooled features
    # w_ref:     (crt, Cin)       f32 folded conv weights (crt = nbins*Cr)
    # shift_ref: (crt, 1)         f32 folded BN shift
    # mask_ref:  (crt, bb_pad)    f32 block-diagonal bin mask (0/1)
    # z_ref:     (1, crt, bb_pad) f32 post-ReLU pooled features (channel-major)
    zT = jnp.dot(w_ref[...], p_ref[0], preferred_element_type=jnp.float32)
    z_ref[0] = jnp.maximum(zT + shift_ref[...], 0.0) * mask_ref[...]


def _conv_bn_relu(pooled, w_T, shift, mask_T, *, vmem_limit):
    N, Cin, bb_pad = pooled.shape
    crt = w_T.shape[0]
    return pl.pallas_call(
        _conv_bn_relu_kernel,
        out_shape=jax.ShapeDtypeStruct((N, crt, bb_pad), jnp.float32),
        grid=(N,),
        in_specs=[
            pl.BlockSpec((1, Cin, bb_pad), lambda n: (n, 0, 0)),
            pl.BlockSpec((crt, Cin), lambda n: (0, 0)),
            pl.BlockSpec((crt, 1), lambda n: (0, 0)),
            pl.BlockSpec((crt, bb_pad), lambda n: (0, 0)),
        ],
        out_specs=pl.BlockSpec((1, crt, bb_pad), lambda n: (n, 0, 0)),
        compiler_params=pltpu.CompilerParams(
            dimension_semantics=("parallel",),
            vmem_limit_bytes=vmem_limit),
    )(pooled, w_T, shift, mask_T)


# ----------------------------------------------------------------------------
# Kernel 3: bilinear upsample of all bins + fused channel concat, NCHW-direct.
# Writes one (Cin + crt, hw_tile) lane-dense slab per grid step: the first Cin
# rows are the exact f32 passthrough copy of x, the rest are the branches.
# ----------------------------------------------------------------------------
def _upsample_concat_kernel(x_ref, z_ref, u_ref, o_ref):
    # x_ref: (1, Cin, hw_tile)        f32   z_ref: (1, crt, bb_pad) f32
    # u_ref: (bb_pad, hw_tile)        f32
    # o_ref: (1, Cin + crt, hw_tile)  f32
    cin = x_ref.shape[1]
    o_ref[0, :cin, :] = x_ref[0]                       # exact passthrough of x
    o_ref[0, cin:, :] = jnp.dot(z_ref[0], u_ref[...],
                                preferred_element_type=jnp.float32)


def _upsample_concat(x_flat, z, u_T, *, hw_tile, vmem_limit):
    N, Cin, HW_pad = x_flat.shape
    _, crt, bb_pad = z.shape
    n_hw = HW_pad // hw_tile
    return pl.pallas_call(
        _upsample_concat_kernel,
        out_shape=jax.ShapeDtypeStruct((N, Cin + crt, HW_pad), jnp.float32),
        grid=(N, n_hw),
        in_specs=[
            pl.BlockSpec((1, Cin, hw_tile), lambda n, t: (n, 0, t)),
            pl.BlockSpec((1, crt, bb_pad), lambda n, t: (n, 0, 0)),
            pl.BlockSpec((bb_pad, hw_tile), lambda n, t: (0, t)),
        ],
        out_specs=pl.BlockSpec((1, Cin + crt, hw_tile), lambda n, t: (n, 0, t)),
        compiler_params=pltpu.CompilerParams(
            dimension_semantics=("parallel", "parallel"),
            vmem_limit_bytes=vmem_limit),
    )(x_flat, z, u_T)


# ----------------------------------------------------------------------------
# Parameter / operator setup (hoisted out of forward)
# ----------------------------------------------------------------------------
def make_ppm_params(key, in_dim, reduction_dim, bins, H, W):
    eps = 1e-5
    HW = H * W
    HW_pad = _round_up(HW, 128)                 # lane-aligned padded spatial size
    nbins = len(bins)
    bb_total = sum(b * b for b in bins)
    bb_pad = _round_up(bb_total, 8)             # pad pooled-row axis to sublanes
    crt = nbins * reduction_dim

    m_T = np.zeros((HW_pad, bb_pad), np.float32)    # stacked pool operator (HW, BB)
    u_T = np.zeros((bb_pad, HW_pad), np.float32)    # stacked upsample operator (BB, HW)
    mask_T = np.zeros((crt, bb_pad), np.float32)    # block-diagonal bin mask
    w_rows, shift_rows, per_bin = [], [], []

    off = 0
    for k, b in enumerate(bins):
        key, k_w, k_g, k_b = jax.random.split(key, 4)
        # Conv2d(in_dim, reduction_dim, 1, bias=False)
        w = 0.1 * jax.random.normal(k_w, (reduction_dim, in_dim), jnp.float32)
        # BatchNorm2d(reduction_dim), eval mode with running stats
        gamma = 1.0 + 0.1 * jax.random.normal(k_g, (reduction_dim,), jnp.float32)
        beta = 0.1 * jax.random.normal(k_b, (reduction_dim,), jnp.float32)
        running_mean = jnp.zeros((reduction_dim,), jnp.float32)
        running_var = jnp.ones((reduction_dim,), jnp.float32)
        scale = gamma / jnp.sqrt(running_var + eps)
        shift_k = beta - running_mean * scale
        w_folded = np.asarray(w) * np.asarray(scale)[:, None]   # (Cr, Cin)

        bb = b * b
        pool2d = np.kron(adaptive_pool_matrix_1d(H, b),
                         adaptive_pool_matrix_1d(W, b))          # (bb, HW)
        up2d = np.kron(bilinear_upsample_matrix_1d(H, b),
                       bilinear_upsample_matrix_1d(W, b))        # (HW, bb)
        m_T[:HW, off:off + bb] = pool2d.T        # padded HW rows stay zero
        u_T[off:off + bb, :HW] = up2d.T
        mask_T[k * reduction_dim:(k + 1) * reduction_dim, off:off + bb] = 1.0
        w_rows.append(w_folded)
        shift_rows.append(np.asarray(shift_k))
        per_bin.append({"bin": b, "wt": jnp.asarray(w_folded.T),
                        "shift": jnp.asarray(shift_k)})
        off += bb

    return {
        "m_T": jnp.asarray(m_T, jnp.bfloat16),            # pool operator, fed to MXU in bf16
        "u_T": jnp.asarray(u_T),                          # f32: exact bilinear upsample
        "mask_T": jnp.asarray(mask_T),
        # f32 folded conv weights; could be stored bf16 if Cin*crt gets very large.
        "w_T": jnp.asarray(np.concatenate(w_rows, axis=0)),    # (crt, Cin)
        "shift": jnp.asarray(np.concatenate(shift_rows)).reshape(crt, 1),
        "per_bin": per_bin,                               # f32 masters (reference)
        "bins": tuple(bins),
        "reduction_dim": reduction_dim,
        "in_dim": in_dim,
        "hw": HW, "hw_pad": HW_pad, "bb_pad": bb_pad, "H": H, "W": W,
    }


# ----------------------------------------------------------------------------
# Forward
# ----------------------------------------------------------------------------
def ppm_forward(x, params, *, hw_tile_pool=None, hw_tile_up=None):
    """x: (N, Cin, H, W) f32.  Returns (N, Cin + len(bins)*Cr, H, W) f32."""
    N, Cin, H, W = x.shape
    HW = H * W
    assert HW == params["hw"], "params were built for a different H, W"
    assert Cin == params["in_dim"]
    HW_pad = params["hw_pad"]
    bb_pad = params["bb_pad"]
    crt = params["w_T"].shape[0]

    if hw_tile_pool is None:
        hw_tile_pool = _choose_hw_tile(HW_pad, 1024)   # x block <= Cin*1024*4 B
    if hw_tile_up is None:
        hw_tile_up = _choose_hw_tile(HW_pad, 512)      # out block is (Cin+crt)-wide
    assert HW_pad % hw_tile_pool == 0 and HW_pad % hw_tile_up == 0

    vmem_limit = _vmem_limit_bytes()

    # NCHW -> (N, Cin, HW): a pure reshape, no transpose, no cast — the kernels
    # consume the activation in its native channel-major f32 layout.
    x_flat = x.reshape(N, Cin, HW)
    if HW_pad != HW:
        # Zero-pad the flattened spatial axis so 128-lane tiles divide evenly;
        # padded pool-operator columns are zero, so results are unchanged.
        x_flat = jnp.pad(x_flat, ((0, 0), (0, 0), (0, HW_pad - HW)))

    pooled = _pool(x_flat, params["m_T"], hw_tile=hw_tile_pool,
                   bb_pad=bb_pad, vmem_limit=vmem_limit)        # (N, Cin, BB) f32
    z = _conv_bn_relu(pooled, params["w_T"], params["shift"],
                      params["mask_T"], vmem_limit=vmem_limit)  # (N, crt, BB) f32
    out = _upsample_concat(x_flat, z, params["u_T"],
                           hw_tile=hw_tile_up,
                           vmem_limit=vmem_limit)               # (N, Cin+crt, HW_pad)

    return out[:, :, :HW].reshape(N, Cin + crt, H, W)


# ----------------------------------------------------------------------------
# Pure-JAX f32 reference (per-bin, un-fused) for correctness checking
# ----------------------------------------------------------------------------
def ppm_reference(x, params):
    N, Cin, H, W = x.shape
    HW = H * W
    xf = jnp.transpose(x, (0, 2, 3, 1)).reshape(N, HW, Cin)
    outs = [x]
    for pb in params["per_bin"]:
        b = pb["bin"]
        mp = jnp.asarray(np.kron(adaptive_pool_matrix_1d(H, b),
                                 adaptive_pool_matrix_1d(W, b)))
        up = jnp.asarray(np.kron(bilinear_upsample_matrix_1d(H, b),
                                 bilinear_upsample_matrix_1d(W, b)))
        pooled = jnp.einsum('ph,nhc->npc', mp, xf)
        z = jnp.maximum(jnp.einsum('npc,cr->npr', pooled, pb["wt"]) + pb["shift"], 0.0)
        o = jnp.einsum('hp,npr->nhr', up, z)
        Cr = pb["wt"].shape[1]
        outs.append(jnp.transpose(o.reshape(N, H, W, Cr), (0, 3, 1, 2)))
    return jnp.concatenate(outs, axis=1)


if __name__ == "__main__":
    key = jax.random.PRNGKey(0)
    N, Cin, H, W = 2, 4, 16, 16
    reduction_dim = 4
    bins = (1, 2, 3, 6)

    key, k_x, k_p = jax.random.split(key, 3)
    x = jax.random.normal(k_x, (N, Cin, H, W), jnp.float32)
    params = make_ppm_params(k_p, Cin, reduction_dim, bins, H, W)

    # hw_tile=128 forces the multi-tile (accumulating) path even at this small size.
    forward = jax.jit(lambda xx: ppm_forward(xx, params,
                                             hw_tile_pool=128, hw_tile_up=128))
    out = forward(x)
    jax.block_until_ready(out)

    expected_channels = Cin + len(bins) * reduction_dim
    assert out.shape == (N, expected_channels, H, W), out.shape

    ref = ppm_reference(x, params)
    np.testing.assert_allclose(np.asarray(out), np.asarray(ref),
                               rtol=2e-2, atol=2e-2)
    print("KERNEL_OK")
</pallas_src>

<mosaic_0001>
module attributes {stable_mosaic.version = 11 : i64} {
  func.func @_upsample_concat_kernel(%arg0: i32, %arg1: i32, %arg2: memref<1x4x128xf32, #tpu.memory_space<vmem>>, %arg3: memref<1x16x56xf32, #tpu.memory_space<vmem>>, %arg4: memref<56x128xf32, #tpu.memory_space<vmem>>, %arg5: memref<1x20x128xf32, #tpu.memory_space<vmem>>) attributes {dimension_semantics = [#tpu.dimension_semantics<parallel>, #tpu.dimension_semantics<parallel>], iteration_bounds = array<i64: 2, 2>, scalar_prefetch = 0 : i64, scratch_operands = 0 : i64, tpu.core_type = #tpu.core_type<tc>, window_params = [{transform_indices = @transform_0, window_bounds = array<i64: 1, 4, 128>}, {transform_indices = @transform_1, window_bounds = array<i64: 1, 16, 56>}, {transform_indices = @transform_2, window_bounds = array<i64: 56, 128>}, {transform_indices = @transform_3, window_bounds = array<i64: 1, 20, 128>}]} {
    %c0 = arith.constant 0 : index
    %c0_0 = arith.constant 0 : index
    %c0_1 = arith.constant 0 : index
    %0 = vector.load %arg2[%c0, %c0_0, %c0_1] : memref<1x4x128xf32, #tpu.memory_space<vmem>>, vector<1x4x128xf32>
    %1 = vector.shape_cast %0 : vector<1x4x128xf32> to vector<4x128xf32>
    %c0_2 = arith.constant 0 : index
    %c0_3 = arith.constant 0 : index
    %c0_4 = arith.constant 0 : index
    %2 = vector.load %arg5[%c0_2, %c0_3, %c0_4] : memref<1x20x128xf32, #tpu.memory_space<vmem>>, vector<1x4x128xf32>
    %3 = vector.shape_cast %2 : vector<1x4x128xf32> to vector<4x128xf32>
    %4 = vector.shape_cast %1 : vector<4x128xf32> to vector<1x4x128xf32>
    tpu.vector_store %arg5[%c0_2, %c0_3, %c0_4], %4 {strides = array<i32>} : memref<1x20x128xf32, #tpu.memory_space<vmem>>, vector<1x4x128xf32>,
    %c0_5 = arith.constant 0 : index
    %c0_6 = arith.constant 0 : index
    %c0_7 = arith.constant 0 : index
    %5 = vector.load %arg3[%c0_5, %c0_6, %c0_7] : memref<1x16x56xf32, #tpu.memory_space<vmem>>, vector<1x16x56xf32>
    %6 = vector.shape_cast %5 : vector<1x16x56xf32> to vector<16x56xf32>
    %c0_8 = arith.constant 0 : index
    %c0_9 = arith.constant 0 : index
    %7 = vector.load %arg4[%c0_8, %c0_9] : memref<56x128xf32, #tpu.memory_space<vmem>>, vector<56x128xf32>
    %cst = arith.constant dense<0.000000e+00> : vector<16x128xf32>
    %8 = tpu.matmul %6, %7, %cst {dimension_numbers = #tpu.dot_dimension_numbers<[1], [0], [0], [1], [0, 0, 1, 1], [], []>} : vector<16x56xf32>, vector<56x128xf32>, vector<16x128xf32> -> vector<16x128xf32>
    %c0_10 = arith.constant 0 : index
    %c4 = arith.constant 4 : index
    %c0_11 = arith.constant 0 : index
    %9 = vector.load %arg5[%c0_10, %c4, %c0_11] : memref<1x20x128xf32, #tpu.memory_space<vmem>>, vector<1x16x128xf32>
    %10 = vector.shape_cast %9 : vector<1x16x128xf32> to vector<16x128xf32>
    %11 = vector.shape_cast %8 : vector<16x128xf32> to vector<1x16x128xf32>
    tpu.vector_store %arg5[%c0_10, %c4, %c0_11], %11 {strides = array<i32>} : memref<1x20x128xf32, #tpu.memory_space<vmem>>, vector<1x16x128xf32>,
    return
  }
  func.func @transform_0(%arg0: i32, %arg1: i32) -> (i32, i32, i32) {
    %c0_i32 = arith.constant 0 : i32
    %c0_i32_0 = arith.constant 0 : i32
    return %arg0, %c0_i32, %arg1 : i32, i32, i32
  }
  func.func @transform_1(%arg0: i32, %arg1: i32) -> (i32, i32, i32) {
    %c0_i32 = arith.constant 0 : i32
    %c0_i32_0 = arith.constant 0 : i32
    %c0_i32_1 = arith.constant 0 : i32
    return %arg0, %c0_i32, %c0_i32_0 : i32, i32, i32
  }
  func.func @transform_2(%arg0: i32, %arg1: i32) -> (i32, i32) {
    %c0_i32 = arith.constant 0 : i32
    %c0_i32_0 = arith.constant 0 : i32
    return %c0_i32, %arg1 : i32, i32
  }
  func.func @transform_3(%arg0: i32, %arg1: i32) -> (i32, i32, i32) {
    %c0_i32 = arith.constant 0 : i32
    %c0_i32_0 = arith.constant 0 : i32
    return %arg0, %c0_i32, %arg1 : i32, i32, i32
  }
}

module attributes {stable_mosaic.version = 11 : i64} {
  func.func @_pool_kernel(%arg0: i32, %arg1: i32, %arg2: memref<1x4x128xf32, #tpu.memory_space<vmem>>, %arg3: memref<128x56xbf16, #tpu.memory_space<vmem>>, %arg4: memref<1x4x56xf32, #tpu.memory_space<vmem>>) attributes {dimension_semantics = [#tpu.dimension_semantics<parallel>, #tpu.dimension_semantics<arbitrary>], iteration_bounds = array<i64: 2, 2>, scalar_prefetch = 0 : i64, scratch_operands = 0 : i64, tpu.core_type = #tpu.core_type<tc>, window_params = [{transform_indices = @transform_0, window_bounds = array<i64: 1, 4, 128>}, {transform_indices = @transform_1, window_bounds = array<i64: 128, 56>}, {transform_indices = @transform_2, window_bounds = array<i64: 1, 4, 56>}]} {
    %c0_i32 = arith.constant 0 : i32
    %0 = arith.cmpi eq, %arg1, %c0_i32 : i32
    %1 = arith.extui %0 : i1 to i32
    %c0_i32_0 = arith.constant 0 : i32
    %2 = arith.cmpi ne, %1, %c0_i32_0 : i32
    scf.if %2 {
      %cst_11 = arith.constant 0.000000e+00 : f32
      %14 = vector.broadcast %cst_11 : f32 to vector<1x4x56xf32>
      %c0_12 = arith.constant 0 : index
      %c0_13 = arith.constant 0 : index
      %c0_14 = arith.constant 0 : index
      %15 = vector.load %arg4[%c0_12, %c0_13, %c0_14] : memref<1x4x56xf32, #tpu.memory_space<vmem>>, vector<1x4x56xf32>
      tpu.vector_store %arg4[%c0_12, %c0_13, %c0_14], %14 {strides = array<i32>} : memref<1x4x56xf32, #tpu.memory_space<vmem>>, vector<1x4x56xf32>,
    } else {
    }
    %c0 = arith.constant 0 : index
    %c0_1 = arith.constant 0 : index
    %c0_2 = arith.constant 0 : index
    %3 = vector.load %arg2[%c0, %c0_1, %c0_2] : memref<1x4x128xf32, #tpu.memory_space<vmem>>, vector<1x4x128xf32>
    %4 = vector.shape_cast %3 : vector<1x4x128xf32> to vector<4x128xf32>
    %5 = arith.truncf %4 : vector<4x128xf32> to vector<4x128xbf16>
    %c0_3 = arith.constant 0 : index
    %c0_4 = arith.constant 0 : index
    %c0_5 = arith.constant 0 : index
    %6 = vector.load %arg4[%c0_3, %c0_4, %c0_5] : memref<1x4x56xf32, #tpu.memory_space<vmem>>, vector<1x4x56xf32>
    %7 = vector.shape_cast %6 : vector<1x4x56xf32> to vector<4x56xf32>
    %c0_6 = arith.constant 0 : index
    %c0_7 = arith.constant 0 : index
    %8 = vector.load %arg3[%c0_6, %c0_7] : memref<128x56xbf16, #tpu.memory_space<vmem>>, vector<128x56xbf16>
    %cst = arith.constant dense<0.000000e+00> : vector<4x56xf32>
    %9 = tpu.matmul %5, %8, %cst {dimension_numbers = #tpu.dot_dimension_numbers<[1], [0], [0], [1], [0, 0, 1, 1], [], []>} : vector<4x128xbf16>, vector<128x56xbf16>, vector<4x56xf32> -> vector<4x56xf32>
    %10 = arith.addf %7, %9 : vector<4x56xf32>
    %c0_8 = arith.constant 0 : index
    %c0_9 = arith.constant 0 : index
    %c0_10 = arith.constant 0 : index
    %11 = vector.load %arg4[%c0_8, %c0_9, %c0_10] : memref<1x4x56xf32, #tpu.memory_space<vmem>>, vector<1x4x56xf32>
    %12 = vector.shape_cast %11 : vector<1x4x56xf32> to vector<4x56xf32>
    %13 = vector.shape_cast %10 : vector<4x56xf32> to vector<1x4x56xf32>
    tpu.vector_store %arg4[%c0_8, %c0_9, %c0_10], %13 {strides = array<i32>} : memref<1x4x56xf32, #tpu.memory_space<vmem>>, vector<1x4x56xf32>,
    return
  }
  func.func @transform_0(%arg0: i32, %arg1: i32) -> (i32, i32, i32) {
    %c0_i32 = arith.constant 0 : i32
    %c0_i32_0 = arith.constant 0 : i32
    return %arg0, %c0_i32, %arg1 : i32, i32, i32
  }
  func.func @transform_1(%arg0: i32, %arg1: i32) -> (i32, i32) {
    %c0_i32 = arith.constant 0 : i32
    %c0_i32_0 = arith.constant 0 : i32
    return %arg1, %c0_i32 : i32, i32
  }
  func.func @transform_2(%arg0: i32, %arg1: i32) -> (i32, i32, i32) {
    %c0_i32 = arith.constant 0 : i32
    %c0_i32_0 = arith.constant 0 : i32
    %c0_i32_1 = arith.constant 0 : i32
    return %arg0, %c0_i32, %c0_i32_0 : i32, i32, i32
  }
}

module attributes {stable_mosaic.version = 11 : i64} {
  func.func @_conv_bn_relu_kernel(%arg0: i32, %arg1: memref<1x4x56xf32, #tpu.memory_space<vmem>>, %arg2: memref<16x4xf32, #tpu.memory_space<vmem>>, %arg3: memref<16x1xf32, #tpu.memory_space<vmem>>, %arg4: memref<16x56xf32, #tpu.memory_space<vmem>>, %arg5: memref<1x16x56xf32, #tpu.memory_space<vmem>>) attributes {dimension_semantics = [#tpu.dimension_semantics<parallel>], iteration_bounds = array<i64: 2>, scalar_prefetch = 0 : i64, scratch_operands = 0 : i64, tpu.core_type = #tpu.core_type<tc>, window_params = [{transform_indices = @transform_0, window_bounds = array<i64: 1, 4, 56>}, {pipeline_mode = #tpu.pipeline_mode<synchronous>, transform_indices = @transform_1, window_bounds = array<i64: 16, 4>}, {pipeline_mode = #tpu.pipeline_mode<synchronous>, transform_indices = @transform_2, window_bounds = array<i64: 16, 1>}, {pipeline_mode = #tpu.pipeline_mode<synchronous>, transform_indices = @transform_3, window_bounds = array<i64: 16, 56>}, {transform_indices = @transform_4, window_bounds = array<i64: 1, 16, 56>}]} {
    %c0 = arith.constant 0 : index
    %c0_0 = arith.constant 0 : index
    %0 = vector.load %arg2[%c0, %c0_0] : memref<16x4xf32, #tpu.memory_space<vmem>>, vector<16x4xf32>
    %c0_1 = arith.constant 0 : index
    %c0_2 = arith.constant 0 : index
    %c0_3 = arith.constant 0 : index
    %1 = vector.load %arg1[%c0_1, %c0_2, %c0_3] : memref<1x4x56xf32, #tpu.memory_space<vmem>>, vector<1x4x56xf32>
    %2 = vector.shape_cast %1 : vector<1x4x56xf32> to vector<4x56xf32>
    %cst = arith.constant dense<0.000000e+00> : vector<16x56xf32>
    %3 = tpu.matmul %0, %2, %cst {dimension_numbers = #tpu.dot_dimension_numbers<[1], [0], [0], [1], [0, 0, 1, 1], [], []>} : vector<16x4xf32>, vector<4x56xf32>, vector<16x56xf32> -> vector<16x56xf32>
    %c0_4 = arith.constant 0 : index
    %c0_5 = arith.constant 0 : index
    %4 = vector.load %arg3[%c0_4, %c0_5] : memref<16x1xf32, #tpu.memory_space<vmem>>, vector<16x1xf32>
    %5 = vector.broadcast %4 : vector<16x1xf32> to vector<16x56xf32>
    %6 = arith.addf %3, %5 : vector<16x56xf32>
    %cst_6 = arith.constant 0.000000e+00 : f32
    %7 = vector.broadcast %cst_6 : f32 to vector<16x56xf32>
    %8 = arith.maximumf %6, %7 : vector<16x56xf32>
    %c0_7 = arith.constant 0 : index
    %c0_8 = arith.constant 0 : index
    %9 = vector.load %arg4[%c0_7, %c0_8] : memref<16x56xf32, #tpu.memory_space<vmem>>, vector<16x56xf32>
    %10 = arith.mulf %8, %9 : vector<16x56xf32>
    %c0_9 = arith.constant 0 : index
    %c0_10 = arith.constant 0 : index
    %c0_11 = arith.constant 0 : index
    %11 = vector.load %arg5[%c0_9, %c0_10, %c0_11] : memref<1x16x56xf32, #tpu.memory_space<vmem>>, vector<1x16x56xf32>
    %12 = vector.shape_cast %11 : vector<1x16x56xf32> to vector<16x56xf32>
    %13 = vector.shape_cast %10 : vector<16x56xf32> to vector<1x16x56xf32>
    tpu.vector_store %arg5[%c0_9, %c0_10, %c0_11], %13 {strides = array<i32>} : memref<1x16x56xf32, #tpu.memory_space<vmem>>, vector<1x16x56xf32>,
    return
  }
  func.func @transform_0(%arg0: i32) -> (i32, i32, i32) {
    %c0_i32 = arith.constant 0 : i32
    %c0_i32_0 = arith.constant 0 : i32
    %c0_i32_1 = arith.constant 0 : i32
    return %arg0, %c0_i32, %c0_i32_0 : i32, i32, i32
  }
  func.func @transform_1(%arg0: i32) -> (i32, i32) {
    %c0_i32 = arith.constant 0 : i32
    %c0_i32_0 = arith.constant 0 : i32
    %c0_i32_1 = arith.constant 0 : i32
    return %c0_i32, %c0_i32_0 : i32, i32
  }
  func.func @transform_2(%arg0: i32) -> (i32, i32) {
    %c0_i32 = arith.constant 0 : i32
    %c0_i32_0 = arith.constant 0 : i32
    %c0_i32_1 = arith.constant 0 : i32
    return %c0_i32, %c0_i32_0 : i32, i32
  }
  func.func @transform_3(%arg0: i32) -> (i32, i32) {
    %c0_i32 = arith.constant 0 : i32
    %c0_i32_0 = arith.constant 0 : i32
    %c0_i32_1 = arith.constant 0 : i32
    return %c0_i32, %c0_i32_0 : i32, i32
  }
  func.func @transform_4(%arg0: i32) -> (i32, i32, i32) {
    %c0_i32 = arith.constant 0 : i32
    %c0_i32_0 = arith.constant 0 : i32
    %c0_i32_1 = arith.constant 0 : i32
    return %arg0, %c0_i32, %c0_i32_0 : i32, i32, i32
  }
}

</mosaic_0001>

<llo_original>
// kernel: _lambda_.4
$region0: #{_lambda_.4}
  #allocation0 [shape = 'u32[]', space=smem, size = 0x4, offset = 0x4, fixed_abs, tag = 'smem constant byte address 0x4 - core index']
  #allocation1 [shape = 'u32[144,128]{1,0:T(1,128)}', space=vmem, size = 0x12000, scoped, tag = 'internal scratch']
  %s0 = inlined_call_operand.vmem [shape: f32[2,4,56], index: 0, kind: input, shape index: {}]
  %s1 = inlined_call_operand.vmem [shape: f32[16,4], index: 1, kind: input, shape index: {}]
  %s2 = inlined_call_operand.vmem [shape: f32[16,1], index: 2, kind: input, shape index: {}]
  %s3 = inlined_call_operand.vmem [shape: f32[16,56], index: 3, kind: input, shape index: {}]
  %s4 = inlined_call_operand.vmem [shape: f32[2,16,56], index: 4, kind: output, shape index: {}]
  %s5 = sld [smem:[#allocation0]]
  $region49: #{_lambda_.4} parent=0
    _
  %s7 = ssub.s32 1, %s5
  %s8 = scalar_select 0, %s7, %s5
  loop: start=0, step=1, limit=4
  $region2: #{_lambda_.4} parent=0 // loop_pre_header
    _
  $region3: #{_lambda_.4} parent=0 // loop_header
    %s10 = sphi 0, %s14
    %p11 = scmp.ge.s32.totalorder %s10, 4
    %s20 = sphi 0, %s22
    %s23 = sphi 0, %s20
    %s24 = sphi 0, %s23
    %s40 = sphi 0, %s24
    %s44 = sphi 0, %s44
    %s46 = sphi 0, %s44
    %s47 = sphi 0, %s46
    %s61 = sphi 0, %s47
    %s65 = sphi 0, %s65
    %s67 = sphi 0, %s65
    %s68 = sphi 0, %s67
    %s82 = sphi 0, %s68
    %s86 = sphi 0, %s86
    %s88 = sphi 0, %s86
    %s89 = sphi 0, %s88
    %s103 = sphi 0, %s89
    %s109 = sphi 0, %s111
    %s112 = sphi 0, %s109
    %s113 = sphi 0, %s112
    %s129 = sphi 0, %s113
  $region4: #{_lambda_.4} parent=0 // loop_header_branch
    %13 = sbr.rel (%p11) target = $region8
  $region5: #{_lambda_.4} parent=0 // loop_body
    %s15 = ssub.s32 %s10, 1
    %s16 = ssub.s32 %s10, 2
    %s17 = sadd.s32 %s10, 1
    %s18 = ssub.s32 %s10, %s17
    %p19 = scmp.eq.s32.totalorder %s18, 0
    %s21 = sadd.s32 %s20, 1
    %s22 = scalar_select %p19, %s20, %s21
    %p25 = pneg %p19
    %p26 = scmp.eq.s32.totalorder %s10, 1
    %p27 = por %p25, %p26
    %p28 = scmp.ne.s32.totalorder %s20, %s23
    %p29 = scmp.eq.s32.totalorder %s10, 0
    %p30 = por %p28, %p29
    %p31 = scmp.ne.s32.totalorder %s20, %s23
    %p32 = scmp.eq.s32.totalorder %s15, 1
    %p33 = por %p31, %p32
    %p34 = scmp.ne.s32.totalorder %s23, %s24
    %p35 = scmp.eq.s32.totalorder %s15, 0
    %p36 = por %p34, %p35
    %p37 = scmp.ne.s32.totalorder %s23, %s24
    %p38 = scmp.eq.s32.totalorder %s16, 1
    %p39 = por %p37, %p38
    %p41 = scmp.ne.s32.totalorder %s24, %s40
    %p42 = scmp.eq.s32.totalorder %s16, 0
    %p43 = por %p41, %p42
    %s45 = sadd.s32 %s44, 1
    %p48 = scmp.eq.s32.totalorder %s10, 1
    %p49 = scmp.ne.s32.totalorder %s44, %s46
    %p50 = scmp.eq.s32.totalorder %s10, 0
    %p51 = por %p49, %p50
    %p52 = scmp.ne.s32.totalorder %s44, %s46
    %p53 = scmp.eq.s32.totalorder %s15, 1
    %p54 = por %p52, %p53
    %p55 = scmp.ne.s32.totalorder %s46, %s47
    %p56 = scmp.eq.s32.totalorder %s15, 0
    %p57 = por %p55, %p56
    %p58 = scmp.ne.s32.totalorder %s46, %s47
    %p59 = scmp.eq.s32.totalorder %s16, 1
    %p60 = por %p58, %p59
    %p62 = scmp.ne.s32.totalorder %s47, %s61
    %p63 = scmp.eq.s32.totalorder %s16, 0
    %p64 = por %p62, %p63
    %s66 = sadd.s32 %s65, 1
    %p69 = scmp.eq.s32.totalorder %s10, 1
    %p70 = scmp.ne.s32.totalorder %s65, %s67
    %p71 = scmp.eq.s32.totalorder %s10, 0
    %p72 = por %p70, %p71
    %p73 = scmp.ne.s32.totalorder %s65, %s67
    %p74 = scmp.eq.s32.totalorder %s15, 1
    %p75 = por %p73, %p74
    %p76 = scmp.ne.s32.totalorder %s67, %s68
    %p77 = scmp.eq.s32.totalorder %s15, 0
    %p78 = por %p76, %p77
    %p79 = scmp.ne.s32.totalorder %s67, %s68
    %p80 = scmp.eq.s32.totalorder %s16, 1
    %p81 = por %p79, %p80
    %p83 = scmp.ne.s32.totalorder %s68, %s82
    %p84 = scmp.eq.s32.totalorder %s16, 0
    %p85 = por %p83, %p84
    %s87 = sadd.s32 %s86, 1
    %p90 = scmp.eq.s32.totalorder %s10, 1
    %p91 = scmp.ne.s32.totalorder %s86, %s88
    %p92 = scmp.eq.s32.totalorder %s10, 0
    %p93 = por %p91, %p92
    %p94 = scmp.ne.s32.totalorder %s86, %s88
    %p95 = scmp.eq.s32.totalorder %s15, 1
    %p96 = por %p94, %p95
    %p97 = scmp.ne.s32.totalorder %s88, %s89
    %p98 = scmp.eq.s32.totalorder %s15, 0
    %p99 = por %p97, %p98
    %p100 = scmp.ne.s32.totalorder %s88, %s89
    %p101 = scmp.eq.s32.totalorder %s16, 1
    %p102 = por %p100, %p101
    %p104 = scmp.ne.s32.totalorder %s89, %s103
    %p105 = scmp.eq.s32.totalorder %s16, 0
    %p106 = por %p104, %p105
    %s107 = ssub.s32 %s10, %s17
    %p108 = scmp.eq.s32.totalorder %s107, 0
    %s110 = sadd.s32 %s109, 1
    %s111 = scalar_select %p108, %s109, %s110
    %p114 = pneg %p108
    %p115 = scmp.eq.s32.totalorder %s10, 1
    %p116 = por %p114, %p115
    %p117 = scmp.ne.s32.totalorder %s109, %s112
    %p118 = scmp.eq.s32.totalorder %s10, 0
    %p119 = por %p117, %p118
    %p120 = scmp.ne.s32.totalorder %s109, %s112
    %p121 = scmp.eq.s32.totalorder %s15, 1
    %p122 = por %p120, %p121
    %p123 = scmp.ne.s32.totalorder %s112, %s113
    %p124 = scmp.eq.s32.totalorder %s15, 0
    %p125 = por %p123, %p124
    %p126 = scmp.ne.s32.totalorder %s112, %s113
    %p127 = scmp.eq.s32.totalorder %s16, 1
    %p128 = por %p126, %p127
    %p130 = scmp.ne.s32.totalorder %s113, %s129
    %p131 = scmp.eq.s32.totalorder %s16, 0
    %p132 = por %p130, %p131
    %p133 = scmp.le.s32.totalorder 1, %s10
    %p134 = scmp.lt.s32.totalorder %s10, 3
    %p135 = pnand %p133, %p134
    %p136 = pneg %p135
    // Predicated region
    $region9: #{_lambda_.4} parent=5 // pred_check
      _
    $region10: #{_lambda_.4} parent=5 // pred_check_branch
      %138 = sbr.rel (%p135) target = $region12
    $region11: #{_lambda_.4} parent=5 // pred_region
      %s139 = ssub.s32 %s10, 1
      // Predicated region
      $region13: #{_lambda_.4} parent=11 // pred_check
        %p140 = pneg %p57
      $region14: #{_lambda_.4} parent=11 // pred_check_branch
        %142 = sbr.rel (%p140) target = $region16
      $region15: #{_lambda_.4} parent=11 // pred_region
        _
      $region16: #{_lambda_.4} parent=11 // pred_fallthru
        _
      // Predicated region
      $region17: #{_lambda_.4} parent=11 // pred_check
        %p143 = pneg %p78
      $region18: #{_lambda_.4} parent=11 // pred_check_branch
        %145 = sbr.rel (%p143) target = $region20
      $region19: #{_lambda_.4} parent=11 // pred_region
        _
      $region20: #{_lambda_.4} parent=11 // pred_fallthru
        _
      // Predicated region
      $region21: #{_lambda_.4} parent=11 // pred_check
        %p146 = pneg %p99
      $region22: #{_lambda_.4} parent=11 // pred_check_branch
        %148 = sbr.rel (%p146) target = $region24
      $region23: #{_lambda_.4} parent=11 // pred_region
        _
      $region24: #{_lambda_.4} parent=11 // pred_fallthru
        _
    $region12: #{_lambda_.4} parent=5 // pred_fallthru
      _
    %p149 = scmp.lt.s32.totalorder %s10, 2
    // Predicated region
    $region25: #{_lambda_.4} parent=5 // pred_check
      %p150 = pneg %p149
    $region26: #{_lambda_.4} parent=5 // pred_check_branch
      %152 = sbr.rel (%p150) target = $region28
    $region27: #{_lambda_.4} parent=5 // pred_region
      // Predicated region
      $region29: #{_lambda_.4} parent=27 // pred_check
        %p153 = pneg %p30
      $region30: #{_lambda_.4} parent=27 // pred_check_branch
        %155 = sbr.rel (%p153) target = $region32
      $region31: #{_lambda_.4} parent=27 // pred_region
        %p156 = scmp.lt.s32.totalorder %s10, 1
        %s157 = scalar_select %p156, %s10, 1
        %s158 = smul.addr %s157, 4
        %s159 = scalar_lea.vmem %s0, %s158
      $region32: #{_lambda_.4} parent=27 // pred_fallthru
        _
    $region28: #{_lambda_.4} parent=5 // pred_fallthru
      _
    %p160 = scmp.le.s32.totalorder 1, %s10
    %p161 = scmp.lt.s32.totalorder %s10, 3
    %p162 = pnand %p160, %p161
    %p163 = pneg %p162
    // Predicated region
    $region33: #{_lambda_.4} parent=5 // pred_check
      _
    $region34: #{_lambda_.4} parent=5 // pred_check_branch
      %165 = sbr.rel (%p162) target = $region36
    $region35: #{_lambda_.4} parent=5 // pred_region
      %s166 = ssub.s32 %s10, 1
      %p167 = scmp.lt.s32.totalorder %s15, 1
      %s168 = scalar_select %p167, %s15, 1
      %s169 = smul.addr %s168, 4
      %s170 = scalar_lea.vmem %s0, %s169
      %p171 = pneg %p36
      %p172 = pneg %p33
      %p173 = pneg %p57
      %p174 = pneg %p54
      %p175 = pneg %p78
      %p176 = pneg %p75
      %p177 = pneg %p99
      %p178 = pneg %p96
      %p179 = pneg %p125
      %p180 = pneg %p122
      %p181 = scmp.lt.s32.totalorder %s15, 1
      %s182 = scalar_select %p181, %s15, 1
      %s183 = smul.addr %s182, 2
      %s184 = smul.addr %s183, 8
      %s185 = scalar_lea.vmem %s4, %s184
      %p186 = scmp.lt.s32.totalorder %s15, 1
      %s187 = scalar_select %p186, %s15, 1
      %s188 = smul.addr %s187, 4
      %s189 = scalar_lea.vmem %s0, %s188
      %p190 = scmp.lt.s32.totalorder %s15, 1
      %s191 = scalar_select %p190, %s15, 1
      %s192 = smul.addr %s191, 2
      %s193 = smul.addr %s192, 8
      %s194 = scalar_lea.vmem %s4, %s193
      %v195 = vld [vmem:[%s1] sm:$0xff]
      %v196 = vld [vmem:[%s1 + $0x8] sm:$0xff]
      %v197 = vld [vmem:[%s189] sm:$0xf]
      %v198 = vld [vmem:[%s2] sm:$0xff]
      %v199 = vld [vmem:[%s2 + $0x8] sm:$0xff]
      %201 = vset.pattern.permute.xlu0 0
      %202 = vperm.xlu0 %201, %v198
      %v203 = vpop.permute.xlu0 %202
      %206 = vset.pattern.permute.xlu0 0
      %207 = vperm.xlu0 %206, %v199
      %v208 = vpop.permute.xlu0 %207
      %vm210 = vcmask 31744
      %v212 = vsel %vm210, %v195, 0
      %v215 = vsel %vm210, %v196, 0
      %vm217 = vcmask 1043456
      %v219 = vsel %vm217, %v197, 0
      %221 = vmatprep.subr.mxu0 0.0
      %222 = vmatpush1.msra.mxu0 %v219
      %223 = vmatprep.subr.mxu0 0.0
      %224 = vmatpush1.msra.mxu0 0.0
      %225 = vmatprep.subr.mxu0 0.0
      %226 = vmatpush1.msra.mxu0 0.0
      %227 = vmatprep.subr.mxu0 0.0
      %228 = vmatpush1.msra.mxu0 0.0
      %229 = vmatprep.subr.mxu0 0.0
      %230 = vmatpush1.msra.mxu0 0.0
      %231 = vmatprep.subr.mxu0 0.0
      %232 = vmatpush1.msra.mxu0 0.0
      %233 = vmatprep.subr.mxu0 0.0
      %234 = vmatpush1.msra.mxu0 0.0
      %235 = vmatprep.subr.mxu0 0.0
      %236 = vmatpush1.msra.mxu0 0.0
      %237 = vmatprep.subr.mxu0 0.0
      %238 = vmatpush1.msra.mxu0 0.0
      %239 = vmatprep.subr.mxu0 0.0
      %240 = vmatpush1.msra.mxu0 0.0
      %241 = vmatprep.subr.mxu0 0.0
      %242 = vmatpush1.msra.mxu0 0.0
      %243 = vmatprep.subr.mxu0 0.0
      %244 = vmatpush1.msra.mxu0 0.0
      %245 = vmatprep.subr.mxu0 0.0
      %246 = vmatpush1.msra.mxu0 0.0
      %247 = vmatprep.subr.mxu0 0.0
      %248 = vmatpush1.msra.mxu0 0.0
      %249 = vmatprep.subr.mxu0 0.0
      %250 = vmatpush1.msra.mxu0 0.0
      %251 = vmatprep.subr.mxu0 0.0
      %252 = vmatpush1.msra.mxu0 0.0
      %253 = vmatprep.subr.mxu0 0.0
      %254 = vmatpush1.msra.mxu0 0.0
      %255 = vmatprep.subr.mxu0 0.0
      %256 = vmatpush1.msra.mxu0 0.0
      %257 = vmatprep.subr.mxu0 0.0
      %258 = vmatpush1.msra.mxu0 0.0
      %259 = vmatprep.subr.mxu0 0.0
      %260 = vmatpush1.msra.mxu0 0.0
      %261 = vmatprep.subr.mxu0 0.0
      %262 = vmatpush1.msra.mxu0 0.0
      %263 = vmatprep.subr.mxu0 0.0
      %264 = vmatpush1.msra.mxu0 0.0
      %265 = vmatprep.subr.mxu0 0.0
      %266 = vmatpush1.msra.mxu0 0.0
      %267 = vmatprep.subr.mxu0 0.0
      %268 = vmatpush1.msra.mxu0 0.0
      %269 = vmatprep.subr.mxu0 0.0
      %270 = vmatpush1.msra.mxu0 0.0
      %271 = vmatprep.subr.mxu0 0.0
      %272 = vmatpush1.msra.mxu0 0.0
      %273 = vmatprep.subr.mxu0 0.0
      %274 = vmatpush1.msra.mxu0 0.0
      %275 = vmatprep.subr.mxu0 0.0
      %276 = vmatpush1.msra.mxu0 0.0
      %277 = vmatprep.subr.mxu0 0.0
      %278 = vmatpush1.msra.mxu0 0.0
      %279 = vmatprep.subr.mxu0 0.0
      %280 = vmatpush1.msra.mxu0 0.0
      %281 = vmatprep.subr.mxu0 0.0
      %282 = vmatpush1.msra.mxu0 0.0
      %283 = vmatprep.subr.mxu0 0.0
      %284 = vmatpush1.msra.mxu0 0.0
      %285 = vmatprep.mubr.f32.mxu0 0.0
      %286 = vmatmul.mubr.f32.gmra.mrb[0].mxu0 %v212
      %v287 = vpop.f32.mrb[0].mxu0
      %v288 = vadd.f32 %v203, %v287
      %v289 = vpop.f32.mrb[0].mxu0
      %290 = vmatprep.mubr.f32.mxu0 0.0
      %291 = vmatmul.mubr.f32.gmra.mrb[0].mxu0 %v215
      %v292 = vpop.f32.mrb[0].mxu0
      %v293 = vadd.f32 %v208, %v292
      %v294 = vpop.f32.mrb[0].mxu0
      %295 = vdwg.mxu0
      %v296 = vmax.f32 %v288, 0.0
      %v297 = vmax.f32 %v293, 0.0
      %v298 = vld [vmem:[%s3] sm:$0xff]
      %v299 = vld [vmem:[%s3 + $0x8] sm:$0xff]
      %v300 = vmul.f32 %v296, %v298
      %v301 = vmul.f32 %v297, %v299
      %vm302 = vcmask 457728
      %303 = vst.msk [vmem:[%s194] sm:$0xff] %vm302, %v300
      %304 = vst.msk [vmem:[%s194 + $0x8] sm:$0xff] %vm302, %v301
      %p305 = scmp.lt.s32.totalorder %s15, 1
      %s306 = scalar_select %p305, %s15, 1
      %s307 = smul.addr %s306, 2
      %s308 = smul.addr %s307, 8
      %s309 = scalar_lea.vmem %s4, %s308
      // Predicated region
      $region37: #{_lambda_.4} parent=35 // pred_check
        %p310 = pneg %p122
      $region38: #{_lambda_.4} parent=35 // pred_check_branch
        %312 = sbr.rel (%p310) target = $region40
      $region39: #{_lambda_.4} parent=35 // pred_region
        _
      $region40: #{_lambda_.4} parent=35 // pred_fallthru
        _
    $region36: #{_lambda_.4} parent=5 // pred_fallthru
      _
    %p313 = scmp.le.s32.totalorder 2, %s10
    // Predicated region
    $region41: #{_lambda_.4} parent=5 // pred_check
      %p314 = pneg %p313
    $region42: #{_lambda_.4} parent=5 // pred_check_branch
      %316 = sbr.rel (%p314) target = $region44
    $region43: #{_lambda_.4} parent=5 // pred_region
      %s317 = ssub.s32 %s10, 2
      // Predicated region
      $region45: #{_lambda_.4} parent=43 // pred_check
        %p318 = pneg %p128
      $region46: #{_lambda_.4} parent=43 // pred_check_branch
        %320 = sbr.rel (%p318) target = $region48
      $region47: #{_lambda_.4} parent=43 // pred_region
        %p321 = scmp.lt.s32.totalorder %s16, 1
        %s322 = scalar_select %p321, %s16, 1
        %s323 = smul.addr %s322, 2
        %s324 = smul.addr %s323, 8
        %s325 = scalar_lea.vmem %s4, %s324
      $region48: #{_lambda_.4} parent=43 // pred_fallthru
        _
    $region44: #{_lambda_.4} parent=5 // pred_fallthru
      _
  $region6: #{_lambda_.4} parent=0 // loop_footer
    %s14 = sadd.s32 1, %s10
  $region7: #{_lambda_.4} parent=0 // loop_footer_branch
    %9 = sbr.rel target = $region3
  $region8: #{_lambda_.4} parent=0 // loop_exit
    _

// kernel: _lambda_.5
$region0: #{_lambda_.5}
  #allocation0 [shape = 'u32[]', space=smem, size = 0x4, offset = 0x4, fixed_abs, tag = 'smem constant byte address 0x4 - core index']
  #allocation1 [shape = 'u32[144,128]{1,0:T(1,128)}', space=vmem, size = 0x12000, scoped, tag = 'internal scratch']
  %s0 = inlined_call_operand.vmem [shape: f32[2,4,256], index: 0, kind: input, shape index: {}]
  %s1 = inlined_call_operand.vmem [shape: f32[2,16,56], index: 1, kind: input, shape index: {}]
  %s2 = inlined_call_operand.vmem [shape: f32[56,256], index: 2, kind: input, shape index: {}]
  %s3 = inlined_call_operand.vmem [shape: f32[2,20,256], index: 3, kind: output, shape index: {}]
  %s4 = sld [smem:[#allocation0]]
  $region117: #{_lambda_.5} parent=0
    _
  %s6 = ssub.s32 1, %s4
  %s7 = scalar_select 0, %s6, %s4
  $region1: #{_lambda_.5} parent=0
    #allocation2 [shape = 'u8[57344]{0}', space=vmem, size = 0xe000, scoped, tag = 'input window, operand 2']
    #allocation3 [shape = 'u8[24576]{0}', space=vmem, size = 0x6000, scoped, tag = 'output window, operand 0']
    loop: start=0, step=1, limit=6
    $region2: #{_lambda_.5} parent=1 // loop_pre_header
      _
    $region3: #{_lambda_.5} parent=1 // loop_header
      %s9 = sphi 0, %s13
      %p10 = scmp.ge.s32.totalorder %s9, 6
      %s16 = sphi 0, %s28
      %s17 = sphi 0, %s24
      %s18 = sphi 0, %s16
      %s19 = sphi 0, %s17
      %s20 = sphi 0, %s18
      %s21 = sphi 0, %s19
      %s33 = sphi 0, %s35
      %s36 = sphi 0, %s33
      %s37 = sphi 0, %s36
      %s53 = sphi 0, %s37
      %s59 = sphi 0, %s61
      %s62 = sphi 0, %s59
      %s63 = sphi 0, %s62
      %s79 = sphi 0, %s63
      %s85 = sphi 0, %s87
      %s88 = sphi 0, %s85
      %s89 = sphi 0, %s88
      %s105 = sphi 0, %s89
      %s113 = sphi 0, %s115
      %s116 = sphi 0, %s113
      %s117 = sphi 0, %s116
      %s133 = sphi 0, %s117
    $region4: #{_lambda_.5} parent=1 // loop_header_branch
      %12 = sbr.rel (%p10) target = $region8
    $region5: #{_lambda_.5} parent=1 // loop_body
      %s14 = ssub.s32 %s9, 1
      %s15 = ssub.s32 %s9, 2
      %s22 = sadd.s32 1, %s17
      %p23 = scmp.ge.s32.totalorder %s22, 2
      %s24 = scalar_select %p23, 0, %s22
      %s25 = sadd.s32 1, %s16
      %s26 = scalar_select %p23, %s25, %s16
      %p27 = scmp.ge.s32.totalorder %s26, 2
      %s28 = scalar_select %p27, 0, %s26
      %s29 = ssub.s32 %s16, %s28
      %s30 = ssub.s32 %s17, %s24
      %s31 = sor.u32 %s29, %s30
      %p32 = scmp.eq.s32.totalorder %s31, 0
      %s34 = sadd.s32 %s33, 1
      %s35 = scalar_select %p32, %s33, %s34
      %p38 = pneg %p32
      %p39 = scmp.eq.s32.totalorder %s9, 3
      %p40 = por %p38, %p39
      %p41 = scmp.ne.s32.totalorder %s33, %s36
      %p42 = scmp.eq.s32.totalorder %s9, 0
      %p43 = por %p41, %p42
      %p44 = scmp.ne.s32.totalorder %s33, %s36
      %p45 = scmp.eq.s32.totalorder %s14, 3
      %p46 = por %p44, %p45
      %p47 = scmp.ne.s32.totalorder %s36, %s37
      %p48 = scmp.eq.s32.totalorder %s14, 0
      %p49 = por %p47, %p48
      %p50 = scmp.ne.s32.totalorder %s36, %s37
      %p51 = scmp.eq.s32.totalorder %s15, 3
      %p52 = por %p50, %p51
      %p54 = scmp.ne.s32.totalorder %s37, %s53
      %p55 = scmp.eq.s32.totalorder %s15, 0
      %p56 = por %p54, %p55
      %s57 = ssub.s32 %s16, %s28
      %p58 = scmp.eq.s32.totalorder %s57, 0
      %s60 = sadd.s32 %s59, 1
      %s61 = scalar_select %p58, %s59, %s60
      %p64 = pneg %p58
      %p65 = scmp.eq.s32.totalorder %s9, 3
      %p66 = por %p64, %p65
      %p67 = scmp.ne.s32.totalorder %s59, %s62
      %p68 = scmp.eq.s32.totalorder %s9, 0
      %p69 = por %p67, %p68
      %p70 = scmp.ne.s32.totalorder %s59, %s62
      %p71 = scmp.eq.s32.totalorder %s14, 3
      %p72 = por %p70, %p71
      %p73 = scmp.ne.s32.totalorder %s62, %s63
      %p74 = scmp.eq.s32.totalorder %s14, 0
      %p75 = por %p73, %p74
      %p76 = scmp.ne.s32.totalorder %s62, %s63
      %p77 = scmp.eq.s32.totalorder %s15, 3
      %p78 = por %p76, %p77
      %p80 = scmp.ne.s32.totalorder %s63, %s79
      %p81 = scmp.eq.s32.totalorder %s15, 0
      %p82 = por %p80, %p81
      %s83 = ssub.s32 %s17, %s24
      %p84 = scmp.eq.s32.totalorder %s83, 0
      %s86 = sadd.s32 %s85, 1
      %s87 = scalar_select %p84, %s85, %s86
      %p90 = pneg %p84
      %p91 = scmp.eq.s32.totalorder %s9, 3
      %p92 = por %p90, %p91
      %p93 = scmp.ne.s32.totalorder %s85, %s88
      %p94 = scmp.eq.s32.totalorder %s9, 0
      %p95 = por %p93, %p94
      %p96 = scmp.ne.s32.totalorder %s85, %s88
      %p97 = scmp.eq.s32.totalorder %s14, 3
      %p98 = por %p96, %p97
      %p99 = scmp.ne.s32.totalorder %s88, %s89
      %p100 = scmp.eq.s32.totalorder %s14, 0
      %p101 = por %p99, %p100
      %p102 = scmp.ne.s32.totalorder %s88, %s89
      %p103 = scmp.eq.s32.totalorder %s15, 3
      %p104 = por %p102, %p103
      %p106 = scmp.ne.s32.totalorder %s89, %s105
      %p107 = scmp.eq.s32.totalorder %s15, 0
      %p108 = por %p106, %p107
      %s109 = ssub.s32 %s16, %s28
      %s110 = ssub.s32 %s17, %s24
      %s111 = sor.u32 %s109, %s110
      %p112 = scmp.eq.s32.totalorder %s111, 0
      %s114 = sadd.s32 %s113, 1
      %s115 = scalar_select %p112, %s113, %s114
      %p118 = pneg %p112
      %p119 = scmp.eq.s32.totalorder %s9, 3
      %p120 = por %p118, %p119
      %p121 = scmp.ne.s32.totalorder %s113, %s116
      %p122 = scmp.eq.s32.totalorder %s9, 0
      %p123 = por %p121, %p122
      %p124 = scmp.ne.s32.totalorder %s113, %s116
      %p125 = scmp.eq.s32.totalorder %s14, 3
      %p126 = por %p124, %p125
      %p127 = scmp.ne.s32.totalorder %s116, %s117
      %p128 = scmp.eq.s32.totalorder %s14, 0
      %p129 = por %p127, %p128
      %p130 = scmp.ne.s32.totalorder %s116, %s117
      %p131 = scmp.eq.s32.totalorder %s15, 3
      %p132 = por %p130, %p131
      %p134 = scmp.ne.s32.totalorder %s117, %s133
      %p135 = scmp.eq.s32.totalorder %s15, 0
      %p136 = por %p134, %p135
      %p137 = scmp.le.s32.totalorder 1, %s9
      %p138 = scmp.lt.s32.totalorder %s9, 5
      %p139 = pnand %p137, %p138
      %p140 = pneg %p139
      // Predicated region
      $region9: #{_lambda_.5} parent=5 // pred_check
        _
      $region10: #{_lambda_.5} parent=5 // pred_check_branch
        %142 = sbr.rel (%p139) target = $region12
      $region11: #{_lambda_.5} parent=5 // pred_region
        %s143 = ssub.s32 %s9, 1
      $region12: #{_lambda_.5} parent=5 // pred_fallthru
        _
      %p144 = scmp.lt.s32.totalorder %s9, 4
      // Predicated region
      $region13: #{_lambda_.5} parent=5 // pred_check
        %p145 = pneg %p144
      $region14: #{_lambda_.5} parent=5 // pred_check_branch
        %147 = sbr.rel (%p145) target = $region16
      $region15: #{_lambda_.5} parent=5 // pred_region
        // Predicated region
        $region17: #{_lambda_.5} parent=15 // pred_check
          %p148 = pneg %p43
        $region18: #{_lambda_.5} parent=15 // pred_check_branch
          %150 = sbr.rel (%p148) target = $region20
        $region19: #{_lambda_.5} parent=15 // pred_region
          %p151 = scmp.lt.s32.totalorder %s16, 1
          %s152 = scalar_select %p151, %s16, 1
          %p153 = scmp.lt.s32.totalorder %s17, 1
          %s154 = scalar_select %p153, %s17, 1
          %s155 = smul.addr %s152, 2
          %s156 = sadd.s32 %s154, %s155
          %s157 = smul.addr %s156, 4
          %s158 = scalar_lea.vmem %s0, %s157
        $region20: #{_lambda_.5} parent=15 // pred_fallthru
          _
        // Predicated region
        $region21: #{_lambda_.5} parent=15 // pred_check
          %p159 = pneg %p69
        $region22: #{_lambda_.5} parent=15 // pred_check_branch
          %161 = sbr.rel (%p159) target = $region24
        $region23: #{_lambda_.5} parent=15 // pred_region
          %p162 = scmp.lt.s32.totalorder %s16, 1
          %s163 = scalar_select %p162, %s16, 1
          %s164 = smul.addr %s163, 2
          %s165 = smul.addr %s164, 8
          %s166 = scalar_lea.vmem %s1, %s165
        $region24: #{_lambda_.5} parent=15 // pred_fallthru
          _
        // Predicated region
        $region25: #{_lambda_.5} parent=15 // pred_check
          %p167 = pneg %p95
        $region26: #{_lambda_.5} parent=15 // pred_check_branch
          %169 = sbr.rel (%p167) target = $region28
        $region27: #{_lambda_.5} parent=15 // pred_region
          %s170 = sand.u32 %s85, 1
          %s171 = sand.u32 %s85, 1
          %s172 = smul.addr %s171, 56
          %s173 = scalar_lea.vmem [#allocation2], %s172
          %s174 = smul.addr %s17, 8
          %s175 = scalar_lea.vmem %s2, %s174
          // Predicated region
          $region29: #{_lambda_.5} parent=27 // pred_check
            _
          $region30: #{_lambda_.5} parent=27 // pred_check_branch
            %177 = sbr.rel (0) target = $region32
          $region31: #{_lambda_.5} parent=27 // pred_region
            // Predicated region
            $region33: #{_lambda_.5} parent=31 // pred_check
              _
            $region34: #{_lambda_.5} parent=31 // pred_check_branch
              %179 = sbr.rel (0) target = $region36
            $region35: #{_lambda_.5} parent=31 // pred_region
              // Predicated region
              $region48: #{_lambda_.5} parent=35 // pred_check
                _
              $region49: #{_lambda_.5} parent=35 // pred_check_branch
                %206 = sbr.rel (0) target = $region51
              $region50: #{_lambda_.5} parent=35 // pred_region
                loop: start=0, step=1, limit=1
                $region52: #{_lambda_.5} parent=50 // loop_pre_header
                  _
                $region53: #{_lambda_.5} parent=50 // loop_header
                  %s208 = sphi 0, %s212
                  %p209 = scmp.ge.s32.totalorder %s208, 1
                  %s213 = sphi %s175, %s175
                  %s214 = sphi %s173, %s173
                $region54: #{_lambda_.5} parent=50 // loop_header_branch
                  %211 = sbr.rel (%p209) target = $region58
                $region55: #{_lambda_.5} parent=50 // loop_body
                  %v215 = vld [vmem:[%s213] sm:$0xff]
                  %216 = vst [vmem:[%s214] sm:$0xff] %v215
                  %v217 = vld [vmem:[%s213 + $0x10] sm:$0xff]
                  %218 = vst [vmem:[%s214 + $0x8] sm:$0xff] %v217
                  %v219 = vld [vmem:[%s213 + $0x20] sm:$0xff]
                  %220 = vst [vmem:[%s214 + $0x10] sm:$0xff] %v219
                  %v221 = vld [vmem:[%s213 + $0x30] sm:$0xff]
                  %222 = vst [vmem:[%s214 + $0x18] sm:$0xff] %v221
                  %v223 = vld [vmem:[%s213 + $0x40] sm:$0xff]
                  %224 = vst [vmem:[%s214 + $0x20] sm:$0xff] %v223
                  %v225 = vld [vmem:[%s213 + $0x50] sm:$0xff]
                  %226 = vst [vmem:[%s214 + $0x28] sm:$0xff] %v225
                  %v227 = vld [vmem:[%s213 + $0x60] sm:$0xff]
                  %228 = vst [vmem:[%s214 + $0x30] sm:$0xff] %v227
                $region56: #{_lambda_.5} parent=50 // loop_footer
                  %s212 = sadd.s32 1, %s208
                $region57: #{_lambda_.5} parent=50 // loop_footer_branch
                  %207 = sbr.rel target = $region53
                $region58: #{_lambda_.5} parent=50 // loop_exit
                  _
              $region51: #{_lambda_.5} parent=35 // pred_fallthru
                _
              // Predicated region
              $region59: #{_lambda_.5} parent=35 // pred_check
                _
              $region60: #{_lambda_.5} parent=35 // pred_check_branch
                %230 = sbr.rel target = $region62
              $region61: #{_lambda_.5} parent=35 // pred_region
                _
              $region62: #{_lambda_.5} parent=35 // pred_fallthru
                _
            $region36: #{_lambda_.5} parent=31 // pred_fallthru
              _
            // Predicated region
            $region37: #{_lambda_.5} parent=31 // pred_check
              _
            $region38: #{_lambda_.5} parent=31 // pred_check_branch
              %181 = sbr.rel target = $region40
            $region39: #{_lambda_.5} parent=31 // pred_region
              loop: start=0, step=1, limit=1
              $region41: #{_lambda_.5} parent=39 // loop_pre_header
                _
              $region42: #{_lambda_.5} parent=39 // loop_header
                %s184 = sphi 0, %s188
                %p185 = scmp.ge.s32.totalorder %s184, 1
                %s189 = sphi %s175, %s175
                %s190 = sphi %s173, %s173
              $region43: #{_lambda_.5} parent=39 // loop_header_branch
                %187 = sbr.rel (%p185) target = $region47
              $region44: #{_lambda_.5} parent=39 // loop_body
                %v191 = vld [vmem:[%s189] sm:$0xff]
                %192 = vst [vmem:[%s190] sm:$0xff] %v191
                %v193 = vld [vmem:[%s189 + $0x10] sm:$0xff]
                %194 = vst [vmem:[%s190 + $0x8] sm:$0xff] %v193
                %v195 = vld [vmem:[%s189 + $0x20] sm:$0xff]
                %196 = vst [vmem:[%s190 + $0x10] sm:$0xff] %v195
                %v197 = vld [vmem:[%s189 + $0x30] sm:$0xff]
                %198 = vst [vmem:[%s190 + $0x18] sm:$0xff] %v197
                %v199 = vld [vmem:[%s189 + $0x40] sm:$0xff]
                %200 = vst [vmem:[%s190 + $0x20] sm:$0xff] %v199
                %v201 = vld [vmem:[%s189 + $0x50] sm:$0xff]
                %202 = vst [vmem:[%s190 + $0x28] sm:$0xff] %v201
                %v203 = vld [vmem:[%s189 + $0x60] sm:$0xff]
                %204 = vst [vmem:[%s190 + $0x30] sm:$0xff] %v203
              $region45: #{_lambda_.5} parent=39 // loop_footer
                %s188 = sadd.s32 1, %s184
              $region46: #{_lambda_.5} parent=39 // loop_footer_branch
                %183 = sbr.rel target = $region42
              $region47: #{_lambda_.5} parent=39 // loop_exit
                _
            $region40: #{_lambda_.5} parent=31 // pred_fallthru
              _
          $region32: #{_lambda_.5} parent=27 // pred_fallthru
            _
          %231 = vnop
        $region28: #{_lambda_.5} parent=15 // pred_fallthru
          _
      $region16: #{_lambda_.5} parent=5 // pred_fallthru
        _
      %p232 = scmp.le.s32.totalorder 1, %s9
      %p233 = scmp.lt.s32.totalorder %s9, 5
      %p234 = pnand %p232, %p233
      %p235 = pneg %p234
      // Predicated region
      $region63: #{_lambda_.5} parent=5 // pred_check
        _
      $region64: #{_lambda_.5} parent=5 // pred_check_branch
        %237 = sbr.rel (%p234) target = $region66
      $region65: #{_lambda_.5} parent=5 // pred_region
        %s238 = ssub.s32 %s9, 1
        %s239 = sand.u32 %s88, 1
        %s240 = sand.u32 %s88, 1
        %s241 = smul.addr %s240, 56
        %s242 = scalar_lea.vmem [#allocation2], %s241
        // Predicated region
        $region67: #{_lambda_.5} parent=65 // pred_check
          %p243 = pneg %p101
        $region68: #{_lambda_.5} parent=65 // pred_check_branch
          %245 = sbr.rel (%p243) target = $region70
        $region69: #{_lambda_.5} parent=65 // pred_region
          _
        $region70: #{_lambda_.5} parent=65 // pred_fallthru
          _
        %p246 = scmp.lt.s32.totalorder %s18, 1
        %s247 = scalar_select %p246, %s18, 1
        %p248 = scmp.lt.s32.totalorder %s19, 1
        %s249 = scalar_select %p248, %s19, 1
        %s250 = smul.addr %s247, 2
        %s251 = sadd.s32 %s249, %s250
        %s252 = smul.addr %s251, 4
        %s253 = scalar_lea.vmem %s0, %s252
        %p254 = pneg %p49
        %p255 = pneg %p46
        %p256 = scmp.lt.s32.totalorder %s18, 1
        %s257 = scalar_select %p256, %s18, 1
        %s258 = smul.addr %s257, 2
        %s259 = smul.addr %s258, 8
        %s260 = scalar_lea.vmem %s1, %s259
        %p261 = pneg %p75
        %p262 = pneg %p72
        %s263 = sand.u32 %s88, 1
        %s264 = sand.u32 %s88, 1
        %s265 = smul.addr %s264, 56
        %s266 = scalar_lea.vmem [#allocation2], %s265
        %p267 = pneg %p101
        %p268 = pneg %p98
        %p269 = pneg %p129
        %p270 = pneg %p126
        %s271 = sand.u32 %s116, 1
        %s272 = sand.u32 %s116, 1
        %s273 = smul.addr %s272, 24
        %s274 = scalar_lea.vmem [#allocation3], %s273
        %p275 = scmp.lt.s32.totalorder %s18, 1
        %s276 = scalar_select %p275, %s18, 1
        %p277 = scmp.lt.s32.totalorder %s19, 1
        %s278 = scalar_select %p277, %s19, 1
        %s279 = smul.addr %s276, 2
        %s280 = sadd.s32 %s278, %s279
        %s281 = smul.addr %s280, 4
        %s282 = scalar_lea.vmem %s0, %s281
        %p283 = scmp.lt.s32.totalorder %s18, 1
        %s284 = scalar_select %p283, %s18, 1
        %s285 = smul.addr %s284, 2
        %s286 = smul.addr %s285, 8
        %s287 = scalar_lea.vmem %s1, %s286
        %v288 = vld [vmem:[%s282] sm:$0xf]
        %289 = vst [vmem:[%s274] sm:$0xf] %v288
        %v290 = vld [vmem:[%s287] sm:$0xff]
        %v291 = vld [vmem:[%s287 + $0x8] sm:$0xff]
        %v292 = vld [vmem:[%s242] sm:$0xff]
        %v293 = vld [vmem:[%s242 + $0x8] sm:$0xff]
        %v294 = vld [vmem:[%s242 + $0x10] sm:$0xff]
        %v295 = vld [vmem:[%s242 + $0x18] sm:$0xff]
        %v296 = vld [vmem:[%s242 + $0x20] sm:$0xff]
        %v297 = vld [vmem:[%s242 + $0x28] sm:$0xff]
        %v298 = vld [vmem:[%s242 + $0x30] sm:$0xff]
        %vm299 = vcmask 457728
        %v301 = vsel %vm299, %v290, 0
        %v304 = vsel %vm299, %v291, 0
        %306 = vmatprep.subr.mxu0 0.0
        %307 = vmatpush1.msra.mxu0 %v292
        %308 = vmatprep.subr.mxu0 0.0
        %309 = vmatpush1.msra.mxu0 %v293
        %310 = vmatprep.subr.mxu0 0.0
        %311 = vmatpush1.msra.mxu0 %v294
        %312 = vmatprep.subr.mxu0 0.0
        %313 = vmatpush1.msra.mxu0 %v295
        %314 = vmatprep.subr.mxu0 0.0
        %315 = vmatpush1.msra.mxu0 %v296
        %316 = vmatprep.subr.mxu0 0.0
        %317 = vmatpush1.msra.mxu0 %v297
        %318 = vmatprep.subr.mxu0 0.0
        %319 = vmatpush1.msra.mxu0 %v298
        %320 = vmatprep.subr.mxu0 0.0
        %321 = vmatpush1.msra.mxu0 0.0
        %322 = vmatprep.subr.mxu0 0.0
        %323 = vmatpush1.msra.mxu0 0.0
        %324 = vmatprep.subr.mxu0 0.0
        %325 = vmatpush1.msra.mxu0 0.0
        %326 = vmatprep.subr.mxu0 0.0
        %327 = vmatpush1.msra.mxu0 0.0
        %328 = vmatprep.subr.mxu0 0.0
        %329 = vmatpush1.msra.mxu0 0.0
        %330 = vmatprep.subr.mxu0 0.0
        %331 = vmatpush1.msra.mxu0 0.0
        %332 = vmatprep.subr.mxu0 0.0
        %333 = vmatpush1.msra.mxu0 0.0
        %334 = vmatprep.subr.mxu0 0.0
        %335 = vmatpush1.msra.mxu0 0.0
        %336 = vmatprep.subr.mxu0 0.0
        %337 = vmatpush1.msra.mxu0 0.0
        %338 = vmatprep.subr.mxu0 0.0
        %339 = vmatpush1.msra.mxu0 0.0
        %340 = vmatprep.subr.mxu0 0.0
        %341 = vmatpush1.msra.mxu0 0.0
        %342 = vmatprep.subr.mxu0 0.0
        %343 = vmatpush1.msra.mxu0 0.0
        %344 = vmatprep.subr.mxu0 0.0
        %345 = vmatpush1.msra.mxu0 0.0
        %346 = vmatprep.subr.mxu0 0.0
        %347 = vmatpush1.msra.mxu0 0.0
        %348 = vmatprep.subr.mxu0 0.0
        %349 = vmatpush1.msra.mxu0 0.0
        %350 = vmatprep.subr.mxu0 0.0
        %351 = vmatpush1.msra.mxu0 0.0
        %352 = vmatprep.subr.mxu0 0.0
        %353 = vmatpush1.msra.mxu0 0.0
        %354 = vmatprep.subr.mxu0 0.0
        %355 = vmatpush1.msra.mxu0 0.0
        %356 = vmatprep.subr.mxu0 0.0
        %357 = vmatpush1.msra.mxu0 0.0
        %358 = vmatprep.subr.mxu0 0.0
        %359 = vmatpush1.msra.mxu0 0.0
        %360 = vmatprep.subr.mxu0 0.0
        %361 = vmatpush1.msra.mxu0 0.0
        %362 = vmatprep.subr.mxu0 0.0
        %363 = vmatpush1.msra.mxu0 0.0
        %364 = vmatprep.subr.mxu0 0.0
        %365 = vmatpush1.msra.mxu0 0.0
        %366 = vmatprep.subr.mxu0 0.0
        %367 = vmatpush1.msra.mxu0 0.0
        %368 = vmatprep.subr.mxu0 0.0
        %369 = vmatpush1.msra.mxu0 0.0
        %370 = vmatprep.mubr.f32.mxu0 0.0
        %371 = vmatmul.mubr.f32.gmra.mrb[0].mxu0 %v301
        %v372 = vpop.f32.mrb[0].mxu0
        %v373 = vadd.f32 0.0, %v372
        %v374 = vpop.f32.mrb[0].mxu0
        %375 = vmatprep.mubr.f32.mxu0 0.0
        %376 = vmatmul.mubr.f32.gmra.mrb[0].mxu0 %v304
        %v377 = vpop.f32.mrb[0].mxu0
        %v378 = vadd.f32 0.0, %v377
        %v379 = vpop.f32.mrb[0].mxu0
        %380 = vdwg.mxu0
        %381 = vst [vmem:[%s274 + $0x4] sm:$0xff] %v373
        %382 = vst [vmem:[%s274 + $0xc] sm:$0xff] %v378
        %s383 = sand.u32 %s116, 1
        %s384 = sand.u32 %s116, 1
        %s385 = smul.addr %s384, 24
        %s386 = scalar_lea.vmem [#allocation3], %s385
        // Predicated region
        $region71: #{_lambda_.5} parent=65 // pred_check
          %p387 = pneg %p126
        $region72: #{_lambda_.5} parent=65 // pred_check_branch
          %389 = sbr.rel (%p387) target = $region74
        $region73: #{_lambda_.5} parent=65 // pred_region
          %s390 = smul.addr %s18, 6
          %s391 = sadd.s32 %s19, %s390
          %s392 = smul.addr %s391, 8
          %s393 = scalar_lea.vmem %s3, %s392
          // Predicated region
          $region75: #{_lambda_.5} parent=73 // pred_check
            _
          $region76: #{_lambda_.5} parent=73 // pred_check_branch
            %395 = sbr.rel (0) target = $region78
          $region77: #{_lambda_.5} parent=73 // pred_region
            // Predicated region
            $region79: #{_lambda_.5} parent=77 // pred_check
              _
            $region80: #{_lambda_.5} parent=77 // pred_check_branch
              %397 = sbr.rel (0) target = $region82
            $region81: #{_lambda_.5} parent=77 // pred_region
              // Predicated region
              $region94: #{_lambda_.5} parent=81 // pred_check
                _
              $region95: #{_lambda_.5} parent=81 // pred_check_branch
                %416 = sbr.rel (0) target = $region97
              $region96: #{_lambda_.5} parent=81 // pred_region
                loop: start=0, step=1, limit=1
                $region98: #{_lambda_.5} parent=96 // loop_pre_header
                  _
                $region99: #{_lambda_.5} parent=96 // loop_header
                  %s418 = sphi 0, %s422
                  %p419 = scmp.ge.s32.totalorder %s418, 1
                  %s423 = sphi %s386, %s386
                  %s424 = sphi %s393, %s393
                $region100: #{_lambda_.5} parent=96 // loop_header_branch
                  %421 = sbr.rel (%p419) target = $region104
                $region101: #{_lambda_.5} parent=96 // loop_body
                  %v425 = vld [vmem:[%s423] sm:$0xff]
                  %426 = vst [vmem:[%s424] sm:$0xff] %v425
                  %v427 = vld [vmem:[%s423 + $0x8] sm:$0xff]
                  %428 = vst [vmem:[%s424 + $0x10] sm:$0xff] %v427
                  %v429 = vld [vmem:[%s423 + $0x10] sm:$0xff]
                  %430 = vst [vmem:[%s424 + $0x20] sm:$0xff] %v429
                $region102: #{_lambda_.5} parent=96 // loop_footer
                  %s422 = sadd.s32 1, %s418
                $region103: #{_lambda_.5} parent=96 // loop_footer_branch
                  %417 = sbr.rel target = $region99
                $region104: #{_lambda_.5} parent=96 // loop_exit
                  _
              $region97: #{_lambda_.5} parent=81 // pred_fallthru
                _
              // Predicated region
              $region105: #{_lambda_.5} parent=81 // pred_check
                _
              $region106: #{_lambda_.5} parent=81 // pred_check_branch
                %432 = sbr.rel target = $region108
              $region107: #{_lambda_.5} parent=81 // pred_region
                _
              $region108: #{_lambda_.5} parent=81 // pred_fallthru
                _
            $region82: #{_lambda_.5} parent=77 // pred_fallthru
              _
            // Predicated region
            $region83: #{_lambda_.5} parent=77 // pred_check
              _
            $region84: #{_lambda_.5} parent=77 // pred_check_branch
              %399 = sbr.rel target = $region86
            $region85: #{_lambda_.5} parent=77 // pred_region
              loop: start=0, step=1, limit=1
              $region87: #{_lambda_.5} parent=85 // loop_pre_header
                _
              $region88: #{_lambda_.5} parent=85 // loop_header
                %s402 = sphi 0, %s406
                %p403 = scmp.ge.s32.totalorder %s402, 1
                %s407 = sphi %s386, %s386
                %s408 = sphi %s393, %s393
              $region89: #{_lambda_.5} parent=85 // loop_header_branch
                %405 = sbr.rel (%p403) target = $region93
              $region90: #{_lambda_.5} parent=85 // loop_body
                %v409 = vld [vmem:[%s407] sm:$0xff]
                %410 = vst [vmem:[%s408] sm:$0xff] %v409
                %v411 = vld [vmem:[%s407 + $0x8] sm:$0xff]
                %412 = vst [vmem:[%s408 + $0x10] sm:$0xff] %v411
                %v413 = vld [vmem:[%s407 + $0x10] sm:$0xff]
                %414 = vst [vmem:[%s408 + $0x20] sm:$0xff] %v413
              $region91: #{_lambda_.5} parent=85 // loop_footer
                %s406 = sadd.s32 1, %s402
              $region92: #{_lambda_.5} parent=85 // loop_footer_branch
                %401 = sbr.rel target = $region88
              $region93: #{_lambda_.5} parent=85 // loop_exit
                _
            $region86: #{_lambda_.5} parent=77 // pred_fallthru
              _
          $region78: #{_lambda_.5} parent=73 // pred_fallthru
            _
          %433 = vnop
        $region74: #{_lambda_.5} parent=65 // pred_fallthru
          _
      $region66: #{_lambda_.5} parent=5 // pred_fallthru
        _
      %p434 = scmp.le.s32.totalorder 2, %s9
      // Predicated region
      $region109: #{_lambda_.5} parent=5 // pred_check
        %p435 = pneg %p434
      $region110: #{_lambda_.5} parent=5 // pred_check_branch
        %437 = sbr.rel (%p435) target = $region112
      $region111: #{_lambda_.5} parent=5 // pred_region
        %s438 = ssub.s32 %s9, 2
        // Predicated region
        $region113: #{_lambda_.5} parent=111 // pred_check
          %p439 = pneg %p132
        $region114: #{_lambda_.5} parent=111 // pred_check_branch
          %441 = sbr.rel (%p439) target = $region116
        $region115: #{_lambda_.5} parent=111 // pred_region
          %s442 = sand.u32 %s117, 1
          %s443 = sand.u32 %s117, 1
          %s444 = smul.addr %s443, 24
          %s445 = scalar_lea.vmem [#allocation3], %s444
        $region116: #{_lambda_.5} parent=111 // pred_fallthru
          _
      $region112: #{_lambda_.5} parent=5 // pred_fallthru
        _
    $region6: #{_lambda_.5} parent=1 // loop_footer
      %s13 = sadd.s32 1, %s9
    $region7: #{_lambda_.5} parent=1 // loop_footer_branch
      %8 = sbr.rel target = $region3
    $region8: #{_lambda_.5} parent=1 // loop_exit
      _

// kernel: _lambda_.3
$region0: #{_lambda_.3}
  #allocation0 [shape = 'u32[]', space=smem, size = 0x4, offset = 0x4, fixed_abs, tag = 'smem constant byte address 0x4 - core index']
  #allocation1 [shape = 'u32[144,128]{1,0:T(1,128)}', space=vmem, size = 0x12000, scoped, tag = 'internal scratch']
  %s0 = inlined_call_operand.vmem [shape: f32[2,4,256], index: 0, kind: input, shape index: {}]
  %s1 = inlined_call_operand.vmem [shape: bf16[256,56], index: 1, kind: input, shape index: {}]
  %s2 = inlined_call_operand.vmem [shape: f32[2,4,56], index: 2, kind: output, shape index: {}]
  %s3 = sld [smem:[#allocation0]]
  $region45: #{_lambda_.3} parent=0
    _
  %s5 = ssub.s32 1, %s3
  %s6 = scalar_select 0, %s5, %s3
  loop: start=0, step=1, limit=6
  $region2: #{_lambda_.3} parent=0 // loop_pre_header
    _
  $region3: #{_lambda_.3} parent=0 // loop_header
    %s8 = sphi 0, %s12
    %p9 = scmp.ge.s32.totalorder %s8, 6
    %s15 = sphi 0, %s27
    %s16 = sphi 0, %s23
    %s17 = sphi 0, %s15
    %s18 = sphi 0, %s16
    %s19 = sphi 0, %s17
    %s20 = sphi 0, %s18
    %s32 = sphi 0, %s34
    %s35 = sphi 0, %s32
    %s36 = sphi 0, %s35
    %s52 = sphi 0, %s36
    %s58 = sphi 0, %s60
    %s61 = sphi 0, %s58
    %s62 = sphi 0, %s61
    %s78 = sphi 0, %s62
    %s84 = sphi 0, %s86
    %s87 = sphi 0, %s84
    %s88 = sphi 0, %s87
    %s104 = sphi 0, %s88
  $region4: #{_lambda_.3} parent=0 // loop_header_branch
    %11 = sbr.rel (%p9) target = $region8
  $region5: #{_lambda_.3} parent=0 // loop_body
    %s13 = ssub.s32 %s8, 1
    %s14 = ssub.s32 %s8, 2
    %s21 = sadd.s32 1, %s16
    %p22 = scmp.ge.s32.totalorder %s21, 2
    %s23 = scalar_select %p22, 0, %s21
    %s24 = sadd.s32 1, %s15
    %s25 = scalar_select %p22, %s24, %s15
    %p26 = scmp.ge.s32.totalorder %s25, 2
    %s27 = scalar_select %p26, 0, %s25
    %s28 = ssub.s32 %s15, %s27
    %s29 = ssub.s32 %s16, %s23
    %s30 = sor.u32 %s28, %s29
    %p31 = scmp.eq.s32.totalorder %s30, 0
    %s33 = sadd.s32 %s32, 1
    %s34 = scalar_select %p31, %s32, %s33
    %p37 = pneg %p31
    %p38 = scmp.eq.s32.totalorder %s8, 3
    %p39 = por %p37, %p38
    %p40 = scmp.ne.s32.totalorder %s32, %s35
    %p41 = scmp.eq.s32.totalorder %s8, 0
    %p42 = por %p40, %p41
    %p43 = scmp.ne.s32.totalorder %s32, %s35
    %p44 = scmp.eq.s32.totalorder %s13, 3
    %p45 = por %p43, %p44
    %p46 = scmp.ne.s32.totalorder %s35, %s36
    %p47 = scmp.eq.s32.totalorder %s13, 0
    %p48 = por %p46, %p47
    %p49 = scmp.ne.s32.totalorder %s35, %s36
    %p50 = scmp.eq.s32.totalorder %s14, 3
    %p51 = por %p49, %p50
    %p53 = scmp.ne.s32.totalorder %s36, %s52
    %p54 = scmp.eq.s32.totalorder %s14, 0
    %p55 = por %p53, %p54
    %s56 = ssub.s32 %s16, %s23
    %p57 = scmp.eq.s32.totalorder %s56, 0
    %s59 = sadd.s32 %s58, 1
    %s60 = scalar_select %p57, %s58, %s59
    %p63 = pneg %p57
    %p64 = scmp.eq.s32.totalorder %s8, 3
    %p65 = por %p63, %p64
    %p66 = scmp.ne.s32.totalorder %s58, %s61
    %p67 = scmp.eq.s32.totalorder %s8, 0
    %p68 = por %p66, %p67
    %p69 = scmp.ne.s32.totalorder %s58, %s61
    %p70 = scmp.eq.s32.totalorder %s13, 3
    %p71 = por %p69, %p70
    %p72 = scmp.ne.s32.totalorder %s61, %s62
    %p73 = scmp.eq.s32.totalorder %s13, 0
    %p74 = por %p72, %p73
    %p75 = scmp.ne.s32.totalorder %s61, %s62
    %p76 = scmp.eq.s32.totalorder %s14, 3
    %p77 = por %p75, %p76
    %p79 = scmp.ne.s32.totalorder %s62, %s78
    %p80 = scmp.eq.s32.totalorder %s14, 0
    %p81 = por %p79, %p80
    %s82 = ssub.s32 %s15, %s27
    %p83 = scmp.eq.s32.totalorder %s82, 0
    %s85 = sadd.s32 %s84, 1
    %s86 = scalar_select %p83, %s84, %s85
    %p89 = pneg %p83
    %p90 = scmp.eq.s32.totalorder %s8, 3
    %p91 = por %p89, %p90
    %p92 = scmp.ne.s32.totalorder %s84, %s87
    %p93 = scmp.eq.s32.totalorder %s8, 0
    %p94 = por %p92, %p93
    %p95 = scmp.ne.s32.totalorder %s84, %s87
    %p96 = scmp.eq.s32.totalorder %s13, 3
    %p97 = por %p95, %p96
    %p98 = scmp.ne.s32.totalorder %s87, %s88
    %p99 = scmp.eq.s32.totalorder %s13, 0
    %p100 = por %p98, %p99
    %p101 = scmp.ne.s32.totalorder %s87, %s88
    %p102 = scmp.eq.s32.totalorder %s14, 3
    %p103 = por %p101, %p102
    %p105 = scmp.ne.s32.totalorder %s88, %s104
    %p106 = scmp.eq.s32.totalorder %s14, 0
    %p107 = por %p105, %p106
    %p108 = scmp.le.s32.totalorder 1, %s8
    %p109 = scmp.lt.s32.totalorder %s8, 5
    %p110 = pnand %p108, %p109
    %p111 = pneg %p110
    // Predicated region
    $region9: #{_lambda_.3} parent=5 // pred_check
      _
    $region10: #{_lambda_.3} parent=5 // pred_check_branch
      %113 = sbr.rel (%p110) target = $region12
    $region11: #{_lambda_.3} parent=5 // pred_region
      %s114 = ssub.s32 %s8, 1
    $region12: #{_lambda_.3} parent=5 // pred_fallthru
      _
    %p115 = scmp.lt.s32.totalorder %s8, 4
    // Predicated region
    $region13: #{_lambda_.3} parent=5 // pred_check
      %p116 = pneg %p115
    $region14: #{_lambda_.3} parent=5 // pred_check_branch
      %118 = sbr.rel (%p116) target = $region16
    $region15: #{_lambda_.3} parent=5 // pred_region
      // Predicated region
      $region17: #{_lambda_.3} parent=15 // pred_check
        %p119 = pneg %p42
      $region18: #{_lambda_.3} parent=15 // pred_check_branch
        %121 = sbr.rel (%p119) target = $region20
      $region19: #{_lambda_.3} parent=15 // pred_region
        %p122 = scmp.lt.s32.totalorder %s15, 1
        %s123 = scalar_select %p122, %s15, 1
        %p124 = scmp.lt.s32.totalorder %s16, 1
        %s125 = scalar_select %p124, %s16, 1
        %s126 = smul.addr %s123, 2
        %s127 = sadd.s32 %s125, %s126
        %s128 = smul.addr %s127, 4
        %s129 = scalar_lea.vmem %s0, %s128
      $region20: #{_lambda_.3} parent=15 // pred_fallthru
        _
      // Predicated region
      $region21: #{_lambda_.3} parent=15 // pred_check
        %p130 = pneg %p68
      $region22: #{_lambda_.3} parent=15 // pred_check_branch
        %132 = sbr.rel (%p130) target = $region24
      $region23: #{_lambda_.3} parent=15 // pred_region
        %s133 = smul.u32 16, %s16
        %p134 = scmp.lt.s32.totalorder %s133, 31
        %s135 = scalar_select %p134, %s133, 31
        %s136 = smul.addr %s135, 4
        %s137 = scalar_lea.vmem %s1, %s136
        %s138 = smul.u32 16, %s16
      $region24: #{_lambda_.3} parent=15 // pred_fallthru
        _
    $region16: #{_lambda_.3} parent=5 // pred_fallthru
      _
    %p139 = scmp.le.s32.totalorder 1, %s8
    %p140 = scmp.lt.s32.totalorder %s8, 5
    %p141 = pnand %p139, %p140
    %p142 = pneg %p141
    // Predicated region
    $region25: #{_lambda_.3} parent=5 // pred_check
      _
    $region26: #{_lambda_.3} parent=5 // pred_check_branch
      %144 = sbr.rel (%p141) target = $region28
    $region27: #{_lambda_.3} parent=5 // pred_region
      %s145 = ssub.s32 %s8, 1
      %p146 = scmp.lt.s32.totalorder %s17, 1
      %s147 = scalar_select %p146, %s17, 1
      %p148 = scmp.lt.s32.totalorder %s18, 1
      %s149 = scalar_select %p148, %s18, 1
      %s150 = smul.addr %s147, 2
      %s151 = sadd.s32 %s149, %s150
      %s152 = smul.addr %s151, 4
      %s153 = scalar_lea.vmem %s0, %s152
      %p154 = pneg %p48
      %p155 = pneg %p45
      %s156 = smul.u32 16, %s18
      %p157 = scmp.lt.s32.totalorder %s156, 31
      %s158 = scalar_select %p157, %s156, 31
      %s159 = smul.addr %s158, 4
      %s160 = scalar_lea.vmem %s1, %s159
      %p161 = pneg %p74
      %p162 = pneg %p71
      %p163 = pneg %p100
      %p164 = pneg %p97
      %p165 = scmp.lt.s32.totalorder %s17, 1
      %s166 = scalar_select %p165, %s17, 1
      %s167 = smul.addr %s166, 4
      %s168 = scalar_lea.vmem %s2, %s167
      %p169 = scmp.lt.s32.totalorder %s17, 1
      %s170 = scalar_select %p169, %s17, 1
      %p171 = scmp.lt.s32.totalorder %s18, 1
      %s172 = scalar_select %p171, %s18, 1
      %s173 = smul.addr %s170, 2
      %s174 = sadd.s32 %s172, %s173
      %s175 = smul.addr %s174, 4
      %s176 = scalar_lea.vmem %s0, %s175
      %s177 = smul.u32 16, %s18
      %p178 = scmp.lt.s32.totalorder %s177, 31
      %s179 = scalar_select %p178, %s177, 31
      %s180 = smul.addr %s179, 4
      %s181 = scalar_lea.vmem %s1, %s180
      %s182 = smul.u32 16, %s18
      %p183 = scmp.lt.s32.totalorder %s17, 1
      %s184 = scalar_select %p183, %s17, 1
      %s185 = smul.addr %s184, 4
      %s186 = scalar_lea.vmem %s2, %s185
      %p188 = scmp.eq.s32.totalorder %s18, 0
      // Predicated region
      $region29: #{_lambda_.3} parent=27 // pred_check
        %p189 = pneg %p188
      $region30: #{_lambda_.3} parent=27 // pred_check_branch
        %191 = sbr.rel (%p189) target = $region32
      $region31: #{_lambda_.3} parent=27 // pred_region
        %vm192 = vcmask 453632
        %193 = vst.msk [vmem:[%s186] sm:$0xf] %vm192, 0.0
      $region32: #{_lambda_.3} parent=27 // pred_fallthru
        _
      %v194 = vld [vmem:[%s176] sm:$0xf]
      %v195 = vpack.c.bf16 %v194, %v194
      %v196 = vld [vmem:[%s186] sm:$0xf]
      %v197 = vld [vmem:[%s181] sm:$0xf]
      %v198 = vld [vmem:[%s181 + $0x4] sm:$0xf]
      %v199 = vld [vmem:[%s181 + $0x8] sm:$0xf]
      %v200 = vld [vmem:[%s181 + $0xc] sm:$0xf]
      %v201 = vld [vmem:[%s181 + $0x10] sm:$0xf]
      %v202 = vld [vmem:[%s181 + $0x14] sm:$0xf]
      %v203 = vld [vmem:[%s181 + $0x18] sm:$0xf]
      %v204 = vld [vmem:[%s181 + $0x1c] sm:$0xf]
      %v205 = vld [vmem:[%s181 + $0x20] sm:$0xf]
      %v206 = vld [vmem:[%s181 + $0x24] sm:$0xf]
      %v207 = vld [vmem:[%s181 + $0x28] sm:$0xf]
      %v208 = vld [vmem:[%s181 + $0x2c] sm:$0xf]
      %v209 = vld [vmem:[%s181 + $0x30] sm:$0xf]
      %v210 = vld [vmem:[%s181 + $0x34] sm:$0xf]
      %v211 = vld [vmem:[%s181 + $0x38] sm:$0xf]
      %v212 = vld [vmem:[%s181 + $0x3c] sm:$0xf]
      %v229 = vunpack.c.l.b16 %v197
      %v230 = vunpack.c.l.b16 %v198
      %v231 = vunpack.c.l.b16 %v199
      %v232 = vunpack.c.l.b16 %v200
      %v233 = vunpack.c.l.b16 %v201
      %v234 = vunpack.c.l.b16 %v202
      %v235 = vunpack.c.l.b16 %v203
      %v236 = vunpack.c.l.b16 %v204
      %v237 = vunpack.c.l.b16 %v205
      %v238 = vunpack.c.l.b16 %v206
      %v239 = vunpack.c.l.b16 %v207
      %v240 = vunpack.c.l.b16 %v208
      %v241 = vunpack.c.l.b16 %v209
      %v242 = vunpack.c.l.b16 %v210
      %v243 = vunpack.c.l.b16 %v211
      %v244 = vunpack.c.l.b16 %v212
      %v245 = vpack.c.b16 %v230, %v229
      %v246 = vpack.c.b16 %v232, %v231
      %v247 = vpack.c.b16 %v234, %v233
      %v248 = vpack.c.b16 %v236, %v235
      %v249 = vpack.c.b16 %v238, %v237
      %v250 = vpack.c.b16 %v240, %v239
      %v251 = vpack.c.b16 %v242, %v241
      %v252 = vpack.c.b16 %v244, %v243
      %261 = vmatprep.subr.bf16.mxu0 0
      %262 = vmatpush1.bf16.msra.mxu0 %v245
      %263 = vmatprep.subr.bf16.mxu0 0
      %264 = vmatpush1.bf16.msra.mxu0 %v246
      %265 = vmatprep.subr.bf16.mxu0 0
      %266 = vmatpush1.bf16.msra.mxu0 %v247
      %267 = vmatprep.subr.bf16.mxu0 0
      %268 = vmatpush1.bf16.msra.mxu0 %v248
      %269 = vmatprep.subr.bf16.mxu0 0
      %270 = vmatpush1.bf16.msra.mxu0 %v249
      %271 = vmatprep.subr.bf16.mxu0 0
      %272 = vmatpush1.bf16.msra.mxu0 %v250
      %273 = vmatprep.subr.bf16.mxu0 0
      %274 = vmatpush1.bf16.msra.mxu0 %v251
      %275 = vmatprep.subr.bf16.mxu0 0
      %276 = vmatpush1.bf16.msra.mxu0 %v252
      %277 = vmatprep.subr.bf16.mxu0 0
      %278 = vmatpush1.bf16.msra.mxu0 0
      %279 = vmatprep.subr.bf16.mxu0 0
      %280 = vmatpush1.bf16.msra.mxu0 0
      %281 = vmatprep.subr.bf16.mxu0 0
      %282 = vmatpush1.bf16.msra.mxu0 0
      %283 = vmatprep.subr.bf16.mxu0 0
      %284 = vmatpush1.bf16.msra.mxu0 0
      %285 = vmatprep.subr.bf16.mxu0 0
      %286 = vmatpush1.bf16.msra.mxu0 0
      %287 = vmatprep.subr.bf16.mxu0 0
      %288 = vmatpush1.bf16.msra.mxu0 0
      %289 = vmatprep.subr.bf16.mxu0 0
      %290 = vmatpush1.bf16.msra.mxu0 0
      %291 = vmatprep.subr.bf16.mxu0 0
      %292 = vmatpush1.bf16.msra.mxu0 0
      %293 = vmatprep.mubr.bf16.mxu0 0
      %294 = vmatmul.mubr.bf16.gmra.mrb[0].mxu0 %v195
      %v295 = vpop.f32.mrb[0].mxu0
      %v296 = vadd.f32 0.0, %v295
      %v297 = vpop.f32.mrb[0].mxu0
      %v298 = vpop.f32.mrb[0].mxu0
      %v299 = vpop.f32.mrb[0].mxu0
      %300 = vdwg.mxu0
      %v301 = vadd.f32 %v196, %v296
      %vm302 = vcmask 453632
      %303 = vst.msk [vmem:[%s186] sm:$0xf] %vm302, %v301
      %p304 = scmp.lt.s32.totalorder %s17, 1
      %s305 = scalar_select %p304, %s17, 1
      %s306 = smul.addr %s305, 4
      %s307 = scalar_lea.vmem %s2, %s306
      // Predicated region
      $region33: #{_lambda_.3} parent=27 // pred_check
        %p308 = pneg %p97
      $region34: #{_lambda_.3} parent=27 // pred_check_branch
        %310 = sbr.rel (%p308) target = $region36
      $region35: #{_lambda_.3} parent=27 // pred_region
        _
      $region36: #{_lambda_.3} parent=27 // pred_fallthru
        _
    $region28: #{_lambda_.3} parent=5 // pred_fallthru
      _
    %p311 = scmp.le.s32.totalorder 2, %s8
    // Predicated region
    $region37: #{_lambda_.3} parent=5 // pred_check
      %p312 = pneg %p311
    $region38: #{_lambda_.3} parent=5 // pred_check_branch
      %314 = sbr.rel (%p312) target = $region40
    $region39: #{_lambda_.3} parent=5 // pred_region
      %s315 = ssub.s32 %s8, 2
      // Predicated region
      $region41: #{_lambda_.3} parent=39 // pred_check
        %p316 = pneg %p103
      $region42: #{_lambda_.3} parent=39 // pred_check_branch
        %318 = sbr.rel (%p316) target = $region44
      $region43: #{_lambda_.3} parent=39 // pred_region
        %p319 = scmp.lt.s32.totalorder %s19, 1
        %s320 = scalar_select %p319, %s19, 1
        %s321 = smul.addr %s320, 4
        %s322 = scalar_lea.vmem %s2, %s321
      $region44: #{_lambda_.3} parent=39 // pred_fallthru
        _
    $region40: #{_lambda_.3} parent=5 // pred_fallthru
      _
  $region6: #{_lambda_.3} parent=0 // loop_footer
    %s12 = sadd.s32 1, %s8
  $region7: #{_lambda_.3} parent=0 // loop_footer_branch
    %7 = sbr.rel target = $region3
  $region8: #{_lambda_.3} parent=0 // loop_exit
    _

</llo_original>
